<compile_context>
chip_gen: v6e
topology: v6e:2x2x1
jax: 0.10.0
libtpu: 0.0.40
codegen_flags: <defaults>
</compile_context>

<pallas_src>
import functools

import jax
import jax.numpy as jnp
from jax import lax
from jax.experimental import pallas as pl
from jax.experimental.pallas import tpu as pltpu


def _simple_model_kernel(x_ref, a_ref, w_enc_ref, b_enc_ref, w_layers_ref,
                         energies_ref, norms_ref, *, num_layers):
    x = x_ref[...]                     # (N, in_dim) f32
    A = a_ref[...]                     # (N, N)      f32, dense 0/1 adjacency
    N = A.shape[0]

    # ---- hoisted graph preprocessing -------------------------------------------------
    deg = jnp.sum(A, axis=1, keepdims=True)                    # (N, 1)
    # NaN/Inf for isolated (zero-degree) nodes, matching the reference behavior.
    inv_deg = pl.reciprocal(deg, approx=True)                  # EUP reciprocal
    a_rw = A * inv_deg                                         # (N, N) random-walk weights

    # GCN normalization, folded:  a_norm @ z == d * (A @ (d*z) + d*z),  d = (deg+1)^(-1/2).
    d = lax.rsqrt(deg + 1.0)                                   # (N, 1)

    # Dirichlet-energy helper vectors (hoisted out of the layer loop).
    rs = deg * inv_deg                                         # (N, 1) row sums of a_rw (~1)
    cs = jnp.sum(a_rw, axis=0, keepdims=True)                  # (1, N) col sums of a_rw

    lane = lax.broadcasted_iota(jnp.int32, (1, num_layers), 1)  # lane index for output packing

    # ---- encoder: h = x @ W_enc^T + b (w_enc_ref already transposed to (in_dim, h_dim))
    h = jnp.dot(x, w_enc_ref[...], preferred_element_type=jnp.float32) + b_enc_ref[...]

    e_acc = jnp.zeros((1, num_layers), jnp.float32)
    n_acc = jnp.zeros((1, num_layers), jnp.float32)

    for i in range(num_layers):
        w = w_layers_ref[i]                                     # (h_dim, h_dim) = W_i^T
        z = d * jnp.dot(h, w, preferred_element_type=jnp.float32)        # d * (X W^T)
        h = jnp.maximum(
            d * (jnp.dot(A, z, preferred_element_type=jnp.float32) + z), 0.0)  # relu(GCN @ XW^T)

        # sq_i = ||h_i||^2, reused for energy and Frobenius norm.
        sq = jnp.sum(h * h, axis=1, keepdims=True)                        # (N, 1)
        arwh = jnp.dot(a_rw, h, preferred_element_type=jnp.float32)       # (N, h_dim)
        cross = jnp.sum(jnp.sum(h * arwh, axis=1, keepdims=True),
                        axis=0, keepdims=True)                            # (1,1) sum a_rw_ij h_i.h_j
        t1 = jnp.sum(rs * sq, axis=0, keepdims=True)                      # (1,1) sum_i rs_i sq_i
        t2 = jnp.dot(cs, sq, preferred_element_type=jnp.float32)          # (1,1) sum_j cs_j sq_j
        e = 0.5 * (t1 + t2) - cross                                       # (1,1) Dirichlet energy
        n = jnp.sum(sq, axis=0, keepdims=True)                            # (1,1) ||h||_F^2

        onehot = (lane == i).astype(jnp.float32)                          # (1, L)
        e_acc = e_acc + onehot * e
        n_acc = n_acc + onehot * n

    # Single lane-dense store per output at the end (no per-layer masked stores).
    energies_ref[...] = e_acc
    norms_ref[...] = n_acc


def simple_model_forward(x, adj, w_enc, b_enc, w_layers):
    """x:(N,in_dim), adj:(N,N) dense 0/1, w_enc:(h,in), b_enc:(h,), w_layers:(L,h,h)."""
    num_layers, h_dim, _ = w_layers.shape
    w_enc_t = jnp.transpose(w_enc)                      # (in_dim, h_dim)
    w_layers_t = jnp.transpose(w_layers, (0, 2, 1))     # (L, h_dim, h_dim) = W_i^T stacked
    b_enc_2d = b_enc.reshape(1, h_dim)

    kernel = functools.partial(_simple_model_kernel, num_layers=num_layers)
    energies, norms = pl.pallas_call(
        kernel,
        out_shape=(jax.ShapeDtypeStruct((1, num_layers), jnp.float32),
                   jax.ShapeDtypeStruct((1, num_layers), jnp.float32)),
        in_specs=[pl.BlockSpec(memory_space=pltpu.MemorySpace.VMEM)] * 5,
        out_specs=(pl.BlockSpec(memory_space=pltpu.MemorySpace.VMEM),
                   pl.BlockSpec(memory_space=pltpu.MemorySpace.VMEM)),
    )(x, adj, w_enc_t, b_enc_2d, w_layers_t)
    return energies[0], norms[0]


def reference_forward(x, adj, w_enc, b_enc, w_layers):
    """Pure-JAX reference mirroring the PyTorch forward (dense form)."""
    deg = adj.sum(axis=1, keepdims=True)
    a_rw = adj / deg
    eye = jnp.eye(adj.shape[0], dtype=jnp.float32)
    a_hat = adj + eye
    dis = 1.0 / jnp.sqrt(a_hat.sum(axis=1))
    a_norm = dis[:, None] * a_hat * dis[None, :]
    h = x @ w_enc.T + b_enc
    energies, norms = [], []
    for i in range(w_layers.shape[0]):
        h = a_norm @ (h @ w_layers[i].T)
        h = jnp.maximum(h, 0.0)
        diff = h[:, None, :] - h[None, :, :]
        pair_sq = jnp.sum(diff * diff, axis=-1)
        energies.append(0.5 * jnp.sum(a_rw * pair_sq))
        norms.append(jnp.sum(h * h))
    return jnp.stack(energies), jnp.stack(norms)


if __name__ == "__main__":
    N, in_dim, h_dim, num_layers = 16, 8, 32, 3
    scale_weights = 2.0

    key = jax.random.PRNGKey(0)
    k1, k2, k3, k4 = jax.random.split(key, 4)

    # Node features.
    x = jax.random.normal(k1, (N, in_dim), dtype=jnp.float32)

    # Deterministic symmetric graph (ring + 2nd-neighbor edges, no self loops).
    idx = jnp.arange(N)
    adj = jnp.zeros((N, N), dtype=jnp.float32)
    for s in (1, 2):
        adj = adj.at[idx, (idx + s) % N].set(1.0)
        adj = adj.at[(idx + s) % N, idx].set(1.0)

    # Deterministic parameters (shapes match nn.Linear(in,h) and L x GCNConv(h,h)).
    w_enc = 0.1 * jax.random.normal(k2, (h_dim, in_dim), dtype=jnp.float32)
    b_enc = 0.1 * jax.random.normal(k3, (h_dim,), dtype=jnp.float32)
    w_layers = scale_weights * 0.1 * jax.random.normal(
        k4, (num_layers, h_dim, h_dim), dtype=jnp.float32)

    energies, norms = simple_model_forward(x, adj, w_enc, b_enc, w_layers)
    jax.block_until_ready((energies, norms))

    e_ref, n_ref = reference_forward(x, adj, w_enc, b_enc, w_layers)
    assert jnp.allclose(energies, e_ref, rtol=1e-3, atol=1e-3), (energies, e_ref)
    assert jnp.allclose(norms, n_ref, rtol=1e-3, atol=1e-3), (norms, n_ref)

    print("KERNEL_OK")
</pallas_src>

<mosaic_0001>
module attributes {stable_mosaic.version = 11 : i64} {
  func.func @_simple_model_kernel(%arg0: memref<16x8xf32, #tpu.memory_space<vmem>>, %arg1: memref<16x16xf32, #tpu.memory_space<vmem>>, %arg2: memref<8x32xf32, #tpu.memory_space<vmem>>, %arg3: memref<1x32xf32, #tpu.memory_space<vmem>>, %arg4: memref<3x32x32xf32, #tpu.memory_space<vmem>>, %arg5: memref<1x3xf32, #tpu.memory_space<vmem>>, %arg6: memref<1x3xf32, #tpu.memory_space<vmem>>) attributes {dimension_semantics = [], scalar_prefetch = 0 : i64, scratch_operands = 0 : i64, tpu.core_type = #tpu.core_type<tc>} {
    %c0 = arith.constant 0 : index
    %c0_0 = arith.constant 0 : index
    %0 = vector.load %arg0[%c0, %c0_0] : memref<16x8xf32, #tpu.memory_space<vmem>>, vector<16x8xf32>
    %c0_1 = arith.constant 0 : index
    %c0_2 = arith.constant 0 : index
    %1 = vector.load %arg1[%c0_1, %c0_2] : memref<16x16xf32, #tpu.memory_space<vmem>>, vector<16x16xf32>
    %cst = arith.constant dense<0.000000e+00> : vector<16xf32>
    %2 = vector.multi_reduction <add>, %1, %cst [1] : vector<16x16xf32> to vector<16xf32>
    %3 = vector.shape_cast %2 : vector<16xf32> to vector<16x1xf32>
    %4 = tpu.reciprocal %3 {approx = true} : vector<16x1xf32> -> vector<16x1xf32>
    %5 = vector.broadcast %4 : vector<16x1xf32> to vector<16x16xf32>
    %6 = arith.mulf %1, %5 : vector<16x16xf32>
    %cst_3 = arith.constant 1.000000e+00 : f32
    %7 = vector.broadcast %cst_3 : f32 to vector<16x1xf32>
    %8 = arith.addf %3, %7 : vector<16x1xf32>
    %9 = math.rsqrt %8 : vector<16x1xf32>
    %10 = arith.mulf %3, %4 : vector<16x1xf32>
    %cst_4 = arith.constant dense<0.000000e+00> : vector<16xf32>
    %11 = vector.multi_reduction <add>, %6, %cst_4 [0] : vector<16x16xf32> to vector<16xf32>
    %12 = vector.shape_cast %11 : vector<16xf32> to vector<1x16xf32>
    %13 = tpu.iota {dimensions = array<i32: 1>} : vector<1x3xi32>
    %c0_5 = arith.constant 0 : index
    %c0_6 = arith.constant 0 : index
    %14 = vector.load %arg2[%c0_5, %c0_6] : memref<8x32xf32, #tpu.memory_space<vmem>>, vector<8x32xf32>
    %cst_7 = arith.constant dense<0.000000e+00> : vector<16x32xf32>
    %15 = tpu.matmul %0, %14, %cst_7 {dimension_numbers = #tpu.dot_dimension_numbers<[1], [0], [0], [1], [0, 0, 1, 1], [], []>} : vector<16x8xf32>, vector<8x32xf32>, vector<16x32xf32> -> vector<16x32xf32>
    %c0_8 = arith.constant 0 : index
    %c0_9 = arith.constant 0 : index
    %16 = vector.load %arg3[%c0_8, %c0_9] : memref<1x32xf32, #tpu.memory_space<vmem>>, vector<1x32xf32>
    %17 = vector.broadcast %16 : vector<1x32xf32> to vector<16x32xf32>
    %18 = arith.addf %15, %17 : vector<16x32xf32>
    %cst_10 = arith.constant 0.000000e+00 : f32
    %19 = vector.broadcast %cst_10 : f32 to vector<1x3xf32>
    %cst_11 = arith.constant 0.000000e+00 : f32
    %20 = vector.broadcast %cst_11 : f32 to vector<1x3xf32>
    %c0_12 = arith.constant 0 : index
    %c0_13 = arith.constant 0 : index
    %c0_14 = arith.constant 0 : index
    %21 = vector.load %arg4[%c0_12, %c0_13, %c0_14] : memref<3x32x32xf32, #tpu.memory_space<vmem>>, vector<1x32x32xf32>
    %22 = vector.shape_cast %21 : vector<1x32x32xf32> to vector<32x32xf32>
    %cst_15 = arith.constant dense<0.000000e+00> : vector<16x32xf32>
    %23 = tpu.matmul %18, %22, %cst_15 {dimension_numbers = #tpu.dot_dimension_numbers<[1], [0], [0], [1], [0, 0, 1, 1], [], []>} : vector<16x32xf32>, vector<32x32xf32>, vector<16x32xf32> -> vector<16x32xf32>
    %24 = vector.broadcast %9 : vector<16x1xf32> to vector<16x32xf32>
    %25 = arith.mulf %24, %23 : vector<16x32xf32>
    %cst_16 = arith.constant dense<0.000000e+00> : vector<16x32xf32>
    %26 = tpu.matmul %1, %25, %cst_16 {dimension_numbers = #tpu.dot_dimension_numbers<[1], [0], [0], [1], [0, 0, 1, 1], [], []>} : vector<16x16xf32>, vector<16x32xf32>, vector<16x32xf32> -> vector<16x32xf32>
    %27 = arith.addf %26, %25 : vector<16x32xf32>
    %28 = vector.broadcast %9 : vector<16x1xf32> to vector<16x32xf32>
    %29 = arith.mulf %28, %27 : vector<16x32xf32>
    %cst_17 = arith.constant 0.000000e+00 : f32
    %30 = vector.broadcast %cst_17 : f32 to vector<16x32xf32>
    %31 = arith.maximumf %29, %30 : vector<16x32xf32>
    %32 = arith.mulf %31, %31 : vector<16x32xf32>
    %cst_18 = arith.constant dense<0.000000e+00> : vector<16xf32>
    %33 = vector.multi_reduction <add>, %32, %cst_18 [1] : vector<16x32xf32> to vector<16xf32>
    %34 = vector.shape_cast %33 : vector<16xf32> to vector<16x1xf32>
    %cst_19 = arith.constant dense<0.000000e+00> : vector<16x32xf32>
    %35 = tpu.matmul %6, %31, %cst_19 {dimension_numbers = #tpu.dot_dimension_numbers<[1], [0], [0], [1], [0, 0, 1, 1], [], []>} : vector<16x16xf32>, vector<16x32xf32>, vector<16x32xf32> -> vector<16x32xf32>
    %36 = arith.mulf %31, %35 : vector<16x32xf32>
    %cst_20 = arith.constant dense<0.000000e+00> : vector<16xf32>
    %37 = vector.multi_reduction <add>, %36, %cst_20 [1] : vector<16x32xf32> to vector<16xf32>
    %38 = vector.shape_cast %37 : vector<16xf32> to vector<16x1xf32>
    %cst_21 = arith.constant dense<0.000000e+00> : vector<1xf32>
    %39 = vector.multi_reduction <add>, %38, %cst_21 [0] : vector<16x1xf32> to vector<1xf32>
    %40 = vector.shape_cast %39 : vector<1xf32> to vector<1x1xf32>
    %41 = arith.mulf %10, %34 : vector<16x1xf32>
    %cst_22 = arith.constant dense<0.000000e+00> : vector<1xf32>
    %42 = vector.multi_reduction <add>, %41, %cst_22 [0] : vector<16x1xf32> to vector<1xf32>
    %43 = vector.shape_cast %42 : vector<1xf32> to vector<1x1xf32>
    %cst_23 = arith.constant dense<0.000000e+00> : vector<1x1xf32>
    %44 = tpu.matmul %12, %34, %cst_23 {dimension_numbers = #tpu.dot_dimension_numbers<[1], [0], [0], [1], [0, 0, 1, 1], [], []>} : vector<1x16xf32>, vector<16x1xf32>, vector<1x1xf32> -> vector<1x1xf32>
    %45 = arith.addf %43, %44 : vector<1x1xf32>
    %cst_24 = arith.constant 5.000000e-01 : f32
    %46 = vector.broadcast %cst_24 : f32 to vector<1x1xf32>
    %47 = arith.mulf %46, %45 : vector<1x1xf32>
    %48 = arith.subf %47, %40 : vector<1x1xf32>
    %cst_25 = arith.constant dense<0.000000e+00> : vector<1xf32>
    %49 = vector.multi_reduction <add>, %34, %cst_25 [0] : vector<16x1xf32> to vector<1xf32>
    %50 = vector.shape_cast %49 : vector<1xf32> to vector<1x1xf32>
    %c0_i32 = arith.constant 0 : i32
    %51 = vector.broadcast %c0_i32 : i32 to vector<1x3xi32>
    %52 = arith.cmpi eq, %13, %51 : vector<1x3xi32>
    %53 = arith.extui %52 : vector<1x3xi1> to vector<1x3xi32>
    %54 = arith.sitofp %53 : vector<1x3xi32> to vector<1x3xf32>
    %55 = vector.broadcast %48 : vector<1x1xf32> to vector<1x3xf32>
    %56 = arith.mulf %54, %55 : vector<1x3xf32>
    %57 = arith.addf %19, %56 : vector<1x3xf32>
    %58 = vector.broadcast %50 : vector<1x1xf32> to vector<1x3xf32>
    %59 = arith.mulf %54, %58 : vector<1x3xf32>
    %60 = arith.addf %20, %59 : vector<1x3xf32>
    %c1 = arith.constant 1 : index
    %c0_26 = arith.constant 0 : index
    %c0_27 = arith.constant 0 : index
    %61 = vector.load %arg4[%c1, %c0_26, %c0_27] : memref<3x32x32xf32, #tpu.memory_space<vmem>>, vector<1x32x32xf32>
    %62 = vector.shape_cast %61 : vector<1x32x32xf32> to vector<32x32xf32>
    %cst_28 = arith.constant dense<0.000000e+00> : vector<16x32xf32>
    %63 = tpu.matmul %31, %62, %cst_28 {dimension_numbers = #tpu.dot_dimension_numbers<[1], [0], [0], [1], [0, 0, 1, 1], [], []>} : vector<16x32xf32>, vector<32x32xf32>, vector<16x32xf32> -> vector<16x32xf32>
    %64 = vector.broadcast %9 : vector<16x1xf32> to vector<16x32xf32>
    %65 = arith.mulf %64, %63 : vector<16x32xf32>
    %cst_29 = arith.constant dense<0.000000e+00> : vector<16x32xf32>
    %66 = tpu.matmul %1, %65, %cst_29 {dimension_numbers = #tpu.dot_dimension_numbers<[1], [0], [0], [1], [0, 0, 1, 1], [], []>} : vector<16x16xf32>, vector<16x32xf32>, vector<16x32xf32> -> vector<16x32xf32>
    %67 = arith.addf %66, %65 : vector<16x32xf32>
    %68 = vector.broadcast %9 : vector<16x1xf32> to vector<16x32xf32>
    %69 = arith.mulf %68, %67 : vector<16x32xf32>
    %cst_30 = arith.constant 0.000000e+00 : f32
    %70 = vector.broadcast %cst_30 : f32 to vector<16x32xf32>
    %71 = arith.maximumf %69, %70 : vector<16x32xf32>
    %72 = arith.mulf %71, %71 : vector<16x32xf32>
    %cst_31 = arith.constant dense<0.000000e+00> : vector<16xf32>
    %73 = vector.multi_reduction <add>, %72, %cst_31 [1] : vector<16x32xf32> to vector<16xf32>
    %74 = vector.shape_cast %73 : vector<16xf32> to vector<16x1xf32>
    %cst_32 = arith.constant dense<0.000000e+00> : vector<16x32xf32>
    %75 = tpu.matmul %6, %71, %cst_32 {dimension_numbers = #tpu.dot_dimension_numbers<[1], [0], [0], [1], [0, 0, 1, 1], [], []>} : vector<16x16xf32>, vector<16x32xf32>, vector<16x32xf32> -> vector<16x32xf32>
    %76 = arith.mulf %71, %75 : vector<16x32xf32>
    %cst_33 = arith.constant dense<0.000000e+00> : vector<16xf32>
    %77 = vector.multi_reduction <add>, %76, %cst_33 [1] : vector<16x32xf32> to vector<16xf32>
    %78 = vector.shape_cast %77 : vector<16xf32> to vector<16x1xf32>
    %cst_34 = arith.constant dense<0.000000e+00> : vector<1xf32>
    %79 = vector.multi_reduction <add>, %78, %cst_34 [0] : vector<16x1xf32> to vector<1xf32>
    %80 = vector.shape_cast %79 : vector<1xf32> to vector<1x1xf32>
    %81 = arith.mulf %10, %74 : vector<16x1xf32>
    %cst_35 = arith.constant dense<0.000000e+00> : vector<1xf32>
    %82 = vector.multi_reduction <add>, %81, %cst_35 [0] : vector<16x1xf32> to vector<1xf32>
    %83 = vector.shape_cast %82 : vector<1xf32> to vector<1x1xf32>
    %cst_36 = arith.constant dense<0.000000e+00> : vector<1x1xf32>
    %84 = tpu.matmul %12, %74, %cst_36 {dimension_numbers = #tpu.dot_dimension_numbers<[1], [0], [0], [1], [0, 0, 1, 1], [], []>} : vector<1x16xf32>, vector<16x1xf32>, vector<1x1xf32> -> vector<1x1xf32>
    %85 = arith.addf %83, %84 : vector<1x1xf32>
    %cst_37 = arith.constant 5.000000e-01 : f32
    %86 = vector.broadcast %cst_37 : f32 to vector<1x1xf32>
    %87 = arith.mulf %86, %85 : vector<1x1xf32>
    %88 = arith.subf %87, %80 : vector<1x1xf32>
    %cst_38 = arith.constant dense<0.000000e+00> : vector<1xf32>
    %89 = vector.multi_reduction <add>, %74, %cst_38 [0] : vector<16x1xf32> to vector<1xf32>
    %90 = vector.shape_cast %89 : vector<1xf32> to vector<1x1xf32>
    %c1_i32 = arith.constant 1 : i32
    %91 = vector.broadcast %c1_i32 : i32 to vector<1x3xi32>
    %92 = arith.cmpi eq, %13, %91 : vector<1x3xi32>
    %93 = arith.extui %92 : vector<1x3xi1> to vector<1x3xi32>
    %94 = arith.sitofp %93 : vector<1x3xi32> to vector<1x3xf32>
    %95 = vector.broadcast %88 : vector<1x1xf32> to vector<1x3xf32>
    %96 = arith.mulf %94, %95 : vector<1x3xf32>
    %97 = arith.addf %57, %96 : vector<1x3xf32>
    %98 = vector.broadcast %90 : vector<1x1xf32> to vector<1x3xf32>
    %99 = arith.mulf %94, %98 : vector<1x3xf32>
    %100 = arith.addf %60, %99 : vector<1x3xf32>
    %c2 = arith.constant 2 : index
    %c0_39 = arith.constant 0 : index
    %c0_40 = arith.constant 0 : index
    %101 = vector.load %arg4[%c2, %c0_39, %c0_40] : memref<3x32x32xf32, #tpu.memory_space<vmem>>, vector<1x32x32xf32>
    %102 = vector.shape_cast %101 : vector<1x32x32xf32> to vector<32x32xf32>
    %cst_41 = arith.constant dense<0.000000e+00> : vector<16x32xf32>
    %103 = tpu.matmul %71, %102, %cst_41 {dimension_numbers = #tpu.dot_dimension_numbers<[1], [0], [0], [1], [0, 0, 1, 1], [], []>} : vector<16x32xf32>, vector<32x32xf32>, vector<16x32xf32> -> vector<16x32xf32>
    %104 = vector.broadcast %9 : vector<16x1xf32> to vector<16x32xf32>
    %105 = arith.mulf %104, %103 : vector<16x32xf32>
    %cst_42 = arith.constant dense<0.000000e+00> : vector<16x32xf32>
    %106 = tpu.matmul %1, %105, %cst_42 {dimension_numbers = #tpu.dot_dimension_numbers<[1], [0], [0], [1], [0, 0, 1, 1], [], []>} : vector<16x16xf32>, vector<16x32xf32>, vector<16x32xf32> -> vector<16x32xf32>
    %107 = arith.addf %106, %105 : vector<16x32xf32>
    %108 = vector.broadcast %9 : vector<16x1xf32> to vector<16x32xf32>
    %109 = arith.mulf %108, %107 : vector<16x32xf32>
    %cst_43 = arith.constant 0.000000e+00 : f32
    %110 = vector.broadcast %cst_43 : f32 to vector<16x32xf32>
    %111 = arith.maximumf %109, %110 : vector<16x32xf32>
    %112 = arith.mulf %111, %111 : vector<16x32xf32>
    %cst_44 = arith.constant dense<0.000000e+00> : vector<16xf32>
    %113 = vector.multi_reduction <add>, %112, %cst_44 [1] : vector<16x32xf32> to vector<16xf32>
    %114 = vector.shape_cast %113 : vector<16xf32> to vector<16x1xf32>
    %cst_45 = arith.constant dense<0.000000e+00> : vector<16x32xf32>
    %115 = tpu.matmul %6, %111, %cst_45 {dimension_numbers = #tpu.dot_dimension_numbers<[1], [0], [0], [1], [0, 0, 1, 1], [], []>} : vector<16x16xf32>, vector<16x32xf32>, vector<16x32xf32> -> vector<16x32xf32>
    %116 = arith.mulf %111, %115 : vector<16x32xf32>
    %cst_46 = arith.constant dense<0.000000e+00> : vector<16xf32>
    %117 = vector.multi_reduction <add>, %116, %cst_46 [1] : vector<16x32xf32> to vector<16xf32>
    %118 = vector.shape_cast %117 : vector<16xf32> to vector<16x1xf32>
    %cst_47 = arith.constant dense<0.000000e+00> : vector<1xf32>
    %119 = vector.multi_reduction <add>, %118, %cst_47 [0] : vector<16x1xf32> to vector<1xf32>
    %120 = vector.shape_cast %119 : vector<1xf32> to vector<1x1xf32>
    %121 = arith.mulf %10, %114 : vector<16x1xf32>
    %cst_48 = arith.constant dense<0.000000e+00> : vector<1xf32>
    %122 = vector.multi_reduction <add>, %121, %cst_48 [0] : vector<16x1xf32> to vector<1xf32>
    %123 = vector.shape_cast %122 : vector<1xf32> to vector<1x1xf32>
    %cst_49 = arith.constant dense<0.000000e+00> : vector<1x1xf32>
    %124 = tpu.matmul %12, %114, %cst_49 {dimension_numbers = #tpu.dot_dimension_numbers<[1], [0], [0], [1], [0, 0, 1, 1], [], []>} : vector<1x16xf32>, vector<16x1xf32>, vector<1x1xf32> -> vector<1x1xf32>
    %125 = arith.addf %123, %124 : vector<1x1xf32>
    %cst_50 = arith.constant 5.000000e-01 : f32
    %126 = vector.broadcast %cst_50 : f32 to vector<1x1xf32>
    %127 = arith.mulf %126, %125 : vector<1x1xf32>
    %128 = arith.subf %127, %120 : vector<1x1xf32>
    %cst_51 = arith.constant dense<0.000000e+00> : vector<1xf32>
    %129 = vector.multi_reduction <add>, %114, %cst_51 [0] : vector<16x1xf32> to vector<1xf32>
    %130 = vector.shape_cast %129 : vector<1xf32> to vector<1x1xf32>
    %c2_i32 = arith.constant 2 : i32
    %131 = vector.broadcast %c2_i32 : i32 to vector<1x3xi32>
    %132 = arith.cmpi eq, %13, %131 : vector<1x3xi32>
    %133 = arith.extui %132 : vector<1x3xi1> to vector<1x3xi32>
    %134 = arith.sitofp %133 : vector<1x3xi32> to vector<1x3xf32>
    %135 = vector.broadcast %128 : vector<1x1xf32> to vector<1x3xf32>
    %136 = arith.mulf %134, %135 : vector<1x3xf32>
    %137 = arith.addf %97, %136 : vector<1x3xf32>
    %138 = vector.broadcast %130 : vector<1x1xf32> to vector<1x3xf32>
    %139 = arith.mulf %134, %138 : vector<1x3xf32>
    %140 = arith.addf %100, %139 : vector<1x3xf32>
    %c0_52 = arith.constant 0 : index
    %c0_53 = arith.constant 0 : index
    %141 = vector.load %arg5[%c0_52, %c0_53] : memref<1x3xf32, #tpu.memory_space<vmem>>, vector<1x3xf32>
    tpu.vector_store %arg5[%c0_52, %c0_53], %137 {strides = array<i32>} : memref<1x3xf32, #tpu.memory_space<vmem>>, vector<1x3xf32>,
    %c0_54 = arith.constant 0 : index
    %c0_55 = arith.constant 0 : index
    %142 = vector.load %arg6[%c0_54, %c0_55] : memref<1x3xf32, #tpu.memory_space<vmem>>, vector<1x3xf32>
    tpu.vector_store %arg6[%c0_54, %c0_55], %140 {strides = array<i32>} : memref<1x3xf32, #tpu.memory_space<vmem>>, vector<1x3xf32>,
    return
  }
}

</mosaic_0001>

<llo_original>
// kernel: tpu_custom_call.1
$region0: #{tpu_custom_call.1}
  #allocation0 [shape = 'u32[]', space=smem, size = 0x4, offset = 0x4, fixed_abs, tag = 'smem constant byte address 0x4 - core index']
  #allocation1 [shape = 'u32[144,128]{1,0:T(1,128)}', space=vmem, size = 0x12000, scoped, tag = 'internal scratch']
  %s0 = inlined_call_operand.vmem [shape: f32[16,8], index: 0, kind: input, shape index: {}]
  %s1 = inlined_call_operand.vmem [shape: f32[16,16], index: 1, kind: input, shape index: {}]
  %s2 = inlined_call_operand.vmem [shape: f32[8,32], index: 2, kind: input, shape index: {}]
  %s3 = inlined_call_operand.vmem [shape: f32[1,32], index: 3, kind: input, shape index: {}]
  %s4 = inlined_call_operand.hbm [shape: f32[3,32,32], index: 4, kind: input, shape index: {}]
  %s5 = inlined_call_operand.hbm [shape: f32[1,3], index: 5, kind: output, shape index: {0}]
  %s6 = inlined_call_operand.hbm [shape: f32[1,3], index: 6, kind: output, shape index: {1}]
  %7 = xla_tuple %s5, %s6
  %s8 = sld [smem:[#allocation0]]
  $region42: #{tpu_custom_call.1} parent=0
    _
  %s10 = ssub.s32 1, %s8
  %s11 = scalar_select 0, %s10, %s8
  $region1: #{tpu_custom_call.1} parent=0
    #allocation2 [shape = 'u8[49152]{0}', space=vmem, size = 0xc000, scoped, tag = 'input window, operand 4, single buffered']
    #allocation3 [shape = 's32[1]{0}', space=sflag, size = 0x4, scoped, tag = 'scoped memory for tpu_custom_call.1']
    #allocation4 [shape = 's32[1]{0}', space=sflag, size = 0x4, scoped, tag = 'scoped memory for tpu_custom_call.1']
    #allocation5 [shape = 'u8[512]{0}', space=vmem, size = 0x400, scoped, tag = 'output window, operand 0, single buffered']
    #allocation6 [shape = 'u8[512]{0}', space=vmem, size = 0x400, scoped, tag = 'output window, operand 1, single buffered']
    #allocation7 [shape = 's32[1]{0}', space=sflag, size = 0x4, scoped, tag = 'scoped memory for tpu_custom_call.1']
    %12 = vsyncpa [#allocation3], 0
    %13 = vsyncpa [#allocation4], 0
    %14 = vsyncpa [#allocation7], 0
    // Predicated region
    $region2: #{tpu_custom_call.1} parent=1 // pred_check
      _
    $region3: #{tpu_custom_call.1} parent=1 // pred_check_branch
      %16 = sbr.rel (0) target = $region5
    $region4: #{tpu_custom_call.1} parent=1 // pred_region
      _
    $region5: #{tpu_custom_call.1} parent=1 // pred_fallthru
      _
    // Predicated region
    $region6: #{tpu_custom_call.1} parent=1 // pred_check
      _
    $region7: #{tpu_custom_call.1} parent=1 // pred_check_branch
      %18 = sbr.rel (0) target = $region9
    $region8: #{tpu_custom_call.1} parent=1 // pred_region
      _
    $region9: #{tpu_custom_call.1} parent=1 // pred_fallthru
      _
    // Predicated region
    $region10: #{tpu_custom_call.1} parent=1 // pred_check
      _
    $region11: #{tpu_custom_call.1} parent=1 // pred_check_branch
      %20 = sbr.rel (0) target = $region13
    $region12: #{tpu_custom_call.1} parent=1 // pred_region
      _
    $region13: #{tpu_custom_call.1} parent=1 // pred_fallthru
      _
    // Predicated region
    $region14: #{tpu_custom_call.1} parent=1 // pred_check
      _
    $region15: #{tpu_custom_call.1} parent=1 // pred_check_branch
      %22 = sbr.rel (0) target = $region17
    $region16: #{tpu_custom_call.1} parent=1 // pred_region
      _
    $region17: #{tpu_custom_call.1} parent=1 // pred_fallthru
      _
    // Predicated region
    $region18: #{tpu_custom_call.1} parent=1 // pred_check
      _
    $region19: #{tpu_custom_call.1} parent=1 // pred_check_branch
      %24 = sbr.rel (0) target = $region21
    $region20: #{tpu_custom_call.1} parent=1 // pred_region
      %s26 = ssub.s32 1536, 1536
      %27 = vsyncadd [#allocation3], %s26
      %s28 = sshll.u32 [#allocation2], 4
      %s29 = int_to_ptr.vmem [resolvable:$true] %s28
      %34 = dma.hbm_to_vmem [thread:$0]  %s4, 1536, %s29, [#allocation3], 128, 128, 8
    $region21: #{tpu_custom_call.1} parent=1 // pred_fallthru
      _
    // Predicated region
    $region22: #{tpu_custom_call.1} parent=1 // pred_check
      _
    $region23: #{tpu_custom_call.1} parent=1 // pred_check_branch
      %36 = sbr.rel (0) target = $region25
    $region24: #{tpu_custom_call.1} parent=1 // pred_region
      %37 = dma.done [#allocation3], 1536
    $region25: #{tpu_custom_call.1} parent=1 // pred_fallthru
      _
    %v38 = vld [vmem:[%s0] sm:$0xff]
    %v39 = vld [vmem:[%s0 + $0x8] sm:$0xff]
    %v40 = vld [vmem:[%s1] sm:$0xff]
    %v41 = vld [vmem:[%s1 + $0x8] sm:$0xff]
    %vm42 = vcmask 130048
    %v43 = vsel %vm42, %v40, 0.0
    %44 = vadd.xlane.f32.xlu0 %v43
    %v45 = vpop.xlane.xlu0 %44
    %v46 = vsel %vm42, %v41, 0.0
    %47 = vadd.xlane.f32.xlu0 %v46
    %v48 = vpop.xlane.xlu0 %47
    %v49 = vrcp.pop %v45
    %v50 = vrcp.pop %v48
    %v51 = vmul.f32 %v40, %v49
    %v52 = vmul.f32 %v41, %v50
    %v53 = vadd.f32 %v45, 1.0
    %v54 = vadd.f32 %v48, 1.0
    %v55 = vrsqrt.pop %v53
    %v56 = vrsqrt.pop %v54
    %v57 = vmul.f32 %v45, %v49
    %v58 = vmul.f32 %v48, %v50
    %v59 = vsel %vm42, %v51, 0.0
    %v60 = vsel %vm42, %v52, 0.0
    %v61 = vadd.f32 %v59, %v60
    %v62 = vrot.slane %v61, 4
    %v63 = vadd.f32 %v61, %v62
    %v64 = vrot.slane %v63, 2
    %v65 = vadd.f32 %v63, %v64
    %v66 = vrot.slane %v65, 1
    %v67 = vadd.f32 %v65, %v66
    %v68 = vlaneseq
    %v69 = vand.u32 %v68, 127
    %v70 = vld [vmem:[%s2] sm:$0xff]
    %v71 = vld [vmem:[%s3] sm:$0x1]
    %v73 = vlaneseq
    %v74 = vshrl.u32 %v73, 7
    %v75 = vsub.s32 0, %v74
    %v76 = vrot.slane %v71, %v75
    %vm78 = vcmask 64512
    %v80 = vsel %vm78, %v38, 0
    %v83 = vsel %vm78, %v39, 0
    %85 = vmatprep.subr.mxu0 0.0
    %86 = vmatpush1.msra.mxu0 0.0
    %87 = vmatprep.subr.mxu0 0.0
    %88 = vmatpush1.msra.mxu0 0.0
    %89 = vmatprep.subr.mxu0 0.0
    %90 = vmatpush1.msra.mxu0 0.0
    %91 = vmatprep.subr.mxu0 0.0
    %92 = vmatpush1.msra.mxu0 0.0
    %93 = vmatprep.subr.mxu0 0.0
    %94 = vmatpush1.msra.mxu0 0.0
    %95 = vmatprep.subr.mxu0 0.0
    %96 = vmatpush1.msra.mxu0 0.0
    %97 = vmatprep.subr.mxu0 0.0
    %98 = vmatpush1.msra.mxu0 0.0
    %99 = vmatprep.subr.mxu0 0.0
    %100 = vmatpush1.msra.mxu0 0.0
    %101 = vmatprep.subr.mxu0 0.0
    %102 = vmatpush1.msra.mxu0 0.0
    %103 = vmatprep.subr.mxu0 0.0
    %104 = vmatpush1.msra.mxu0 0.0
    %105 = vmatprep.subr.mxu0 0.0
    %106 = vmatpush1.msra.mxu0 0.0
    %107 = vmatprep.subr.mxu0 0.0
    %108 = vmatpush1.msra.mxu0 0.0
    %109 = vmatprep.subr.mxu0 0.0
    %110 = vmatpush1.msra.mxu0 0.0
    %111 = vmatprep.subr.mxu0 0.0
    %112 = vmatpush1.msra.mxu0 0.0
    %113 = vmatprep.subr.mxu0 0.0
    %114 = vmatpush1.msra.mxu0 0.0
    %115 = vmatprep.subr.mxu0 0.0
    %116 = vmatpush1.msra.mxu0 %v70
    %117 = vmatprep.subr.mxu0 0.0
    %118 = vmatpush2.msra.mxu0 0.0
    %119 = vmatprep.subr.mxu0 0.0
    %120 = vmatpush2.msra.mxu0 0.0
    %121 = vmatprep.subr.mxu0 0.0
    %122 = vmatpush2.msra.mxu0 0.0
    %123 = vmatprep.subr.mxu0 0.0
    %124 = vmatpush2.msra.mxu0 0.0
    %125 = vmatprep.subr.mxu0 0.0
    %126 = vmatpush2.msra.mxu0 0.0
    %127 = vmatprep.subr.mxu0 0.0
    %128 = vmatpush2.msra.mxu0 0.0
    %129 = vmatprep.subr.mxu0 0.0
    %130 = vmatpush2.msra.mxu0 0.0
    %131 = vmatprep.subr.mxu0 0.0
    %132 = vmatpush2.msra.mxu0 0.0
    %133 = vmatprep.subr.mxu0 0.0
    %134 = vmatpush2.msra.mxu0 0.0
    %135 = vmatprep.subr.mxu0 0.0
    %136 = vmatpush2.msra.mxu0 0.0
    %137 = vmatprep.subr.mxu0 0.0
    %138 = vmatpush2.msra.mxu0 0.0
    %139 = vmatprep.subr.mxu0 0.0
    %140 = vmatpush2.msra.mxu0 0.0
    %141 = vmatprep.subr.mxu0 0.0
    %142 = vmatpush2.msra.mxu0 0.0
    %143 = vmatprep.subr.mxu0 0.0
    %144 = vmatpush2.msra.mxu0 0.0
    %145 = vmatprep.subr.mxu0 0.0
    %146 = vmatpush2.msra.mxu0 0.0
    %147 = vmatprep.subr.mxu0 0.0
    %148 = vmatpush2.msra.mxu0 0.0
    %149 = vmatprep.mubr.f32.mxu0 0.0
    %150 = vmatmul.mubr.f32.gmra.mxu0 %v80
    %v151 = vpop.f32.mrf.mxu0
    %v152 = vadd.f32 %v76, %v151
    %v153 = vpop.f32.mrf.mxu0
    %154 = vmatprep.mubr.f32.mxu0 0.0
    %155 = vmatmul.mubr.f32.gmra.mxu0 %v83
    %v156 = vpop.f32.mrf.mxu0
    %v157 = vadd.f32 %v76, %v156
    %v158 = vpop.f32.mrf.mxu0
    %159 = vdwg.mxu0
    %v160 = vld [vmem:[#allocation2] sm:$0xff]
    %v161 = vld [vmem:[#allocation2 + $0x8] sm:$0xff]
    %v162 = vld [vmem:[#allocation2 + $0x10] sm:$0xff]
    %v163 = vld [vmem:[#allocation2 + $0x18] sm:$0xff]
    %vm164 = vcmask 261120
    %v166 = vsel %vm164, %v152, 0
    %v169 = vsel %vm164, %v157, 0
    %171 = vmatprep.subr.mxu0 0.0
    %172 = vmatpush1.msra.mxu0 0.0
    %173 = vmatprep.subr.mxu0 0.0
    %174 = vmatpush1.msra.mxu0 0.0
    %175 = vmatprep.subr.mxu0 0.0
    %176 = vmatpush1.msra.mxu0 0.0
    %177 = vmatprep.subr.mxu0 0.0
    %178 = vmatpush1.msra.mxu0 0.0
    %179 = vmatprep.subr.mxu0 0.0
    %180 = vmatpush1.msra.mxu0 0.0
    %181 = vmatprep.subr.mxu0 0.0
    %182 = vmatpush1.msra.mxu0 0.0
    %183 = vmatprep.subr.mxu0 0.0
    %184 = vmatpush1.msra.mxu0 0.0
    %185 = vmatprep.subr.mxu0 0.0
    %186 = vmatpush1.msra.mxu0 0.0
    %187 = vmatprep.subr.mxu0 0.0
    %188 = vmatpush1.msra.mxu0 0.0
    %189 = vmatprep.subr.mxu0 0.0
    %190 = vmatpush1.msra.mxu0 0.0
    %191 = vmatprep.subr.mxu0 0.0
    %192 = vmatpush1.msra.mxu0 0.0
    %193 = vmatprep.subr.mxu0 0.0
    %194 = vmatpush1.msra.mxu0 0.0
    %195 = vmatprep.subr.mxu0 0.0
    %196 = vmatpush1.msra.mxu0 %v163
    %197 = vmatprep.subr.mxu0 0.0
    %198 = vmatpush1.msra.mxu0 %v162
    %199 = vmatprep.subr.mxu0 0.0
    %200 = vmatpush1.msra.mxu0 %v161
    %201 = vmatprep.subr.mxu0 0.0
    %202 = vmatpush1.msra.mxu0 %v160
    %203 = vmatprep.subr.mxu0 0.0
    %204 = vmatpush2.msra.mxu0 0.0
    %205 = vmatprep.subr.mxu0 0.0
    %206 = vmatpush2.msra.mxu0 0.0
    %207 = vmatprep.subr.mxu0 0.0
    %208 = vmatpush2.msra.mxu0 0.0
    %209 = vmatprep.subr.mxu0 0.0
    %210 = vmatpush2.msra.mxu0 0.0
    %211 = vmatprep.subr.mxu0 0.0
    %212 = vmatpush2.msra.mxu0 0.0
    %213 = vmatprep.subr.mxu0 0.0
    %214 = vmatpush2.msra.mxu0 0.0
    %215 = vmatprep.subr.mxu0 0.0
    %216 = vmatpush2.msra.mxu0 0.0
    %217 = vmatprep.subr.mxu0 0.0
    %218 = vmatpush2.msra.mxu0 0.0
    %219 = vmatprep.subr.mxu0 0.0
    %220 = vmatpush2.msra.mxu0 0.0
    %221 = vmatprep.subr.mxu0 0.0
    %222 = vmatpush2.msra.mxu0 0.0
    %223 = vmatprep.subr.mxu0 0.0
    %224 = vmatpush2.msra.mxu0 0.0
    %225 = vmatprep.subr.mxu0 0.0
    %226 = vmatpush2.msra.mxu0 0.0
    %227 = vmatprep.subr.mxu0 0.0
    %228 = vmatpush2.msra.mxu0 0.0
    %229 = vmatprep.subr.mxu0 0.0
    %230 = vmatpush2.msra.mxu0 0.0
    %231 = vmatprep.subr.mxu0 0.0
    %232 = vmatpush2.msra.mxu0 0.0
    %233 = vmatprep.subr.mxu0 0.0
    %234 = vmatpush2.msra.mxu0 0.0
    %235 = vmatprep.mubr.f32.mxu0 0.0
    %236 = vmatmul.mubr.f32.gmra.mxu0 %v166
    %v237 = vpop.f32.mrf.mxu0
    %v238 = vadd.f32 0.0, %v237
    %v239 = vpop.f32.mrf.mxu0
    %240 = vmatprep.mubr.f32.mxu0 0.0
    %241 = vmatmul.mubr.f32.gmra.mxu0 %v169
    %v242 = vpop.f32.mrf.mxu0
    %v243 = vadd.f32 0.0, %v242
    %v244 = vpop.f32.mrf.mxu0
    %245 = vdwg.mxu0
    %v246 = vmul.f32 %v55, %v238
    %v247 = vmul.f32 %v56, %v243
    %v249 = vsel %vm42, %v40, 0
    %v252 = vsel %vm42, %v41, 0
    %254 = vmatprep.subr.mxu0 0.0
    %255 = vmatpush1.msra.mxu0 0.0
    %256 = vmatprep.subr.mxu0 0.0
    %257 = vmatpush1.msra.mxu0 0.0
    %258 = vmatprep.subr.mxu0 0.0
    %259 = vmatpush1.msra.mxu0 0.0
    %260 = vmatprep.subr.mxu0 0.0
    %261 = vmatpush1.msra.mxu0 0.0
    %262 = vmatprep.subr.mxu0 0.0
    %263 = vmatpush1.msra.mxu0 0.0
    %264 = vmatprep.subr.mxu0 0.0
    %265 = vmatpush1.msra.mxu0 0.0
    %266 = vmatprep.subr.mxu0 0.0
    %267 = vmatpush1.msra.mxu0 0.0
    %268 = vmatprep.subr.mxu0 0.0
    %269 = vmatpush1.msra.mxu0 0.0
    %270 = vmatprep.subr.mxu0 0.0
    %271 = vmatpush1.msra.mxu0 0.0
    %272 = vmatprep.subr.mxu0 0.0
    %273 = vmatpush1.msra.mxu0 0.0
    %274 = vmatprep.subr.mxu0 0.0
    %275 = vmatpush1.msra.mxu0 0.0
    %276 = vmatprep.subr.mxu0 0.0
    %277 = vmatpush1.msra.mxu0 0.0
    %278 = vmatprep.subr.mxu0 0.0
    %279 = vmatpush1.msra.mxu0 0.0
    %280 = vmatprep.subr.mxu0 0.0
    %281 = vmatpush1.msra.mxu0 0.0
    %282 = vmatprep.subr.mxu0 0.0
    %283 = vmatpush1.msra.mxu0 %v247
    %284 = vmatprep.subr.mxu0 0.0
    %285 = vmatpush1.msra.mxu0 %v246
    %286 = vmatprep.subr.mxu0 0.0
    %287 = vmatpush2.msra.mxu0 0.0
    %288 = vmatprep.subr.mxu0 0.0
    %289 = vmatpush2.msra.mxu0 0.0
    %290 = vmatprep.subr.mxu0 0.0
    %291 = vmatpush2.msra.mxu0 0.0
    %292 = vmatprep.subr.mxu0 0.0
    %293 = vmatpush2.msra.mxu0 0.0
    %294 = vmatprep.subr.mxu0 0.0
    %295 = vmatpush2.msra.mxu0 0.0
    %296 = vmatprep.subr.mxu0 0.0
    %297 = vmatpush2.msra.mxu0 0.0
    %298 = vmatprep.subr.mxu0 0.0
    %299 = vmatpush2.msra.mxu0 0.0
    %300 = vmatprep.subr.mxu0 0.0
    %301 = vmatpush2.msra.mxu0 0.0
    %302 = vmatprep.subr.mxu0 0.0
    %303 = vmatpush2.msra.mxu0 0.0
    %304 = vmatprep.subr.mxu0 0.0
    %305 = vmatpush2.msra.mxu0 0.0
    %306 = vmatprep.subr.mxu0 0.0
    %307 = vmatpush2.msra.mxu0 0.0
    %308 = vmatprep.subr.mxu0 0.0
    %309 = vmatpush2.msra.mxu0 0.0
    %310 = vmatprep.subr.mxu0 0.0
    %311 = vmatpush2.msra.mxu0 0.0
    %312 = vmatprep.subr.mxu0 0.0
    %313 = vmatpush2.msra.mxu0 0.0
    %314 = vmatprep.subr.mxu0 0.0
    %315 = vmatpush2.msra.mxu0 0.0
    %316 = vmatprep.subr.mxu0 0.0
    %317 = vmatpush2.msra.mxu0 0.0
    %318 = vmatprep.mubr.f32.mxu0 0.0
    %319 = vmatmul.mubr.f32.gmra.mxu0 %v249
    %v320 = vpop.f32.mrf.mxu0
    %v321 = vadd.f32 %v246, %v320
    %v322 = vpop.f32.mrf.mxu0
    %323 = vmatprep.mubr.f32.mxu0 0.0
    %324 = vmatmul.mubr.f32.gmra.mxu0 %v252
    %v325 = vpop.f32.mrf.mxu0
    %v326 = vadd.f32 %v247, %v325
    %v327 = vpop.f32.mrf.mxu0
    %328 = vdwg.mxu0
    %v329 = vmul.f32 %v55, %v321
    %v330 = vmul.f32 %v56, %v326
    %v331 = vmax.f32 %v329, 0.0
    %v332 = vmax.f32 %v330, 0.0
    %v333 = vmul.f32 %v331, %v331
    %v334 = vmul.f32 %v332, %v332
    %v335 = vsel %vm164, %v333, 0.0
    %336 = vadd.xlane.f32.xlu0 %v335
    %v337 = vpop.xlane.xlu0 %336
    %v338 = vsel %vm164, %v334, 0.0
    %339 = vadd.xlane.f32.xlu0 %v338
    %v340 = vpop.xlane.xlu0 %339
    %v342 = vsel %vm42, %v51, 0
    %v345 = vsel %vm42, %v52, 0
    %347 = vmatprep.subr.mxu0 0.0
    %348 = vmatpush1.msra.mxu0 0.0
    %349 = vmatprep.subr.mxu0 0.0
    %350 = vmatpush1.msra.mxu0 0.0
    %351 = vmatprep.subr.mxu0 0.0
    %352 = vmatpush1.msra.mxu0 0.0
    %353 = vmatprep.subr.mxu0 0.0
    %354 = vmatpush1.msra.mxu0 0.0
    %355 = vmatprep.subr.mxu0 0.0
    %356 = vmatpush1.msra.mxu0 0.0
    %357 = vmatprep.subr.mxu0 0.0
    %358 = vmatpush1.msra.mxu0 0.0
    %359 = vmatprep.subr.mxu0 0.0
    %360 = vmatpush1.msra.mxu0 0.0
    %361 = vmatprep.subr.mxu0 0.0
    %362 = vmatpush1.msra.mxu0 0.0
    %363 = vmatprep.subr.mxu0 0.0
    %364 = vmatpush1.msra.mxu0 0.0
    %365 = vmatprep.subr.mxu0 0.0
    %366 = vmatpush1.msra.mxu0 0.0
    %367 = vmatprep.subr.mxu0 0.0
    %368 = vmatpush1.msra.mxu0 0.0
    %369 = vmatprep.subr.mxu0 0.0
    %370 = vmatpush1.msra.mxu0 0.0
    %371 = vmatprep.subr.mxu0 0.0
    %372 = vmatpush1.msra.mxu0 0.0
    %373 = vmatprep.subr.mxu0 0.0
    %374 = vmatpush1.msra.mxu0 0.0
    %375 = vmatprep.subr.mxu0 0.0
    %376 = vmatpush1.msra.mxu0 %v332
    %377 = vmatprep.subr.mxu0 0.0
    %378 = vmatpush1.msra.mxu0 %v331
    %379 = vmatprep.subr.mxu0 0.0
    %380 = vmatpush2.msra.mxu0 0.0
    %381 = vmatprep.subr.mxu0 0.0
    %382 = vmatpush2.msra.mxu0 0.0
    %383 = vmatprep.subr.mxu0 0.0
    %384 = vmatpush2.msra.mxu0 0.0
    %385 = vmatprep.subr.mxu0 0.0
    %386 = vmatpush2.msra.mxu0 0.0
    %387 = vmatprep.subr.mxu0 0.0
    %388 = vmatpush2.msra.mxu0 0.0
    %389 = vmatprep.subr.mxu0 0.0
    %390 = vmatpush2.msra.mxu0 0.0
    %391 = vmatprep.subr.mxu0 0.0
    %392 = vmatpush2.msra.mxu0 0.0
    %393 = vmatprep.subr.mxu0 0.0
    %394 = vmatpush2.msra.mxu0 0.0
    %395 = vmatprep.subr.mxu0 0.0
    %396 = vmatpush2.msra.mxu0 0.0
    %397 = vmatprep.subr.mxu0 0.0
    %398 = vmatpush2.msra.mxu0 0.0
    %399 = vmatprep.subr.mxu0 0.0
    %400 = vmatpush2.msra.mxu0 0.0
    %401 = vmatprep.subr.mxu0 0.0
    %402 = vmatpush2.msra.mxu0 0.0
    %403 = vmatprep.subr.mxu0 0.0
    %404 = vmatpush2.msra.mxu0 0.0
    %405 = vmatprep.subr.mxu0 0.0
    %406 = vmatpush2.msra.mxu0 0.0
    %407 = vmatprep.subr.mxu0 0.0
    %408 = vmatpush2.msra.mxu0 0.0
    %409 = vmatprep.subr.mxu0 0.0
    %410 = vmatpush2.msra.mxu0 0.0
    %411 = vmatprep.mubr.f32.mxu0 0.0
    %412 = vmatmul.mubr.f32.gmra.mxu0 %v342
    %v413 = vpop.f32.mrf.mxu0
    %v414 = vadd.f32 0.0, %v413
    %v415 = vpop.f32.mrf.mxu0
    %416 = vmatprep.mubr.f32.mxu0 0.0
    %417 = vmatmul.mubr.f32.gmra.mxu0 %v345
    %v418 = vpop.f32.mrf.mxu0
    %v419 = vadd.f32 0.0, %v418
    %v420 = vpop.f32.mrf.mxu0
    %421 = vdwg.mxu0
    %v422 = vmul.f32 %v331, %v414
    %v423 = vmul.f32 %v332, %v419
    %v424 = vsel %vm164, %v422, 0.0
    %425 = vadd.xlane.f32.xlu0 %v424
    %v426 = vpop.xlane.xlu0 %425
    %v427 = vsel %vm164, %v423, 0.0
    %428 = vadd.xlane.f32.xlu0 %v427
    %v429 = vpop.xlane.xlu0 %428
    %v430 = vadd.f32 %v426, %v429
    %v431 = vrot.slane %v430, 4
    %v432 = vadd.f32 %v430, %v431
    %v433 = vrot.slane %v432, 2
    %v434 = vadd.f32 %v432, %v433
    %v435 = vrot.slane %v434, 1
    %v436 = vadd.f32 %v434, %v435
    %v437 = vmul.f32 %v57, %v337
    %v438 = vmul.f32 %v58, %v340
    %v439 = vadd.f32 %v437, %v438
    %v440 = vrot.slane %v439, 4
    %v441 = vadd.f32 %v439, %v440
    %v442 = vrot.slane %v441, 2
    %v443 = vadd.f32 %v441, %v442
    %v444 = vrot.slane %v443, 1
    %v445 = vadd.f32 %v443, %v444
    %v447 = vsel %vm42, %v67, 0
    %449 = vmatprep.subr.mxu0 0.0
    %450 = vmatpush1.msra.mxu0 0.0
    %451 = vmatprep.subr.mxu0 0.0
    %452 = vmatpush1.msra.mxu0 0.0
    %453 = vmatprep.subr.mxu0 0.0
    %454 = vmatpush1.msra.mxu0 0.0
    %455 = vmatprep.subr.mxu0 0.0
    %456 = vmatpush1.msra.mxu0 0.0
    %457 = vmatprep.subr.mxu0 0.0
    %458 = vmatpush1.msra.mxu0 0.0
    %459 = vmatprep.subr.mxu0 0.0
    %460 = vmatpush1.msra.mxu0 0.0
    %461 = vmatprep.subr.mxu0 0.0
    %462 = vmatpush1.msra.mxu0 0.0
    %463 = vmatprep.subr.mxu0 0.0
    %464 = vmatpush1.msra.mxu0 0.0
    %465 = vmatprep.subr.mxu0 0.0
    %466 = vmatpush1.msra.mxu0 0.0
    %467 = vmatprep.subr.mxu0 0.0
    %468 = vmatpush1.msra.mxu0 0.0
    %469 = vmatprep.subr.mxu0 0.0
    %470 = vmatpush1.msra.mxu0 0.0
    %471 = vmatprep.subr.mxu0 0.0
    %472 = vmatpush1.msra.mxu0 0.0
    %473 = vmatprep.subr.mxu0 0.0
    %474 = vmatpush1.msra.mxu0 0.0
    %475 = vmatprep.subr.mxu0 0.0
    %476 = vmatpush1.msra.mxu0 0.0
    %477 = vmatprep.subr.mxu0 0.0
    %478 = vmatpush1.msra.mxu0 %v340
    %479 = vmatprep.subr.mxu0 0.0
    %480 = vmatpush1.msra.mxu0 %v337
    %481 = vmatprep.subr.mxu0 0.0
    %482 = vmatpush2.msra.mxu0 0.0
    %483 = vmatprep.subr.mxu0 0.0
    %484 = vmatpush2.msra.mxu0 0.0
    %485 = vmatprep.subr.mxu0 0.0
    %486 = vmatpush2.msra.mxu0 0.0
    %487 = vmatprep.subr.mxu0 0.0
    %488 = vmatpush2.msra.mxu0 0.0
    %489 = vmatprep.subr.mxu0 0.0
    %490 = vmatpush2.msra.mxu0 0.0
    %491 = vmatprep.subr.mxu0 0.0
    %492 = vmatpush2.msra.mxu0 0.0
    %493 = vmatprep.subr.mxu0 0.0
    %494 = vmatpush2.msra.mxu0 0.0
    %495 = vmatprep.subr.mxu0 0.0
    %496 = vmatpush2.msra.mxu0 0.0
    %497 = vmatprep.subr.mxu0 0.0
    %498 = vmatpush2.msra.mxu0 0.0
    %499 = vmatprep.subr.mxu0 0.0
    %500 = vmatpush2.msra.mxu0 0.0
    %501 = vmatprep.subr.mxu0 0.0
    %502 = vmatpush2.msra.mxu0 0.0
    %503 = vmatprep.subr.mxu0 0.0
    %504 = vmatpush2.msra.mxu0 0.0
    %505 = vmatprep.subr.mxu0 0.0
    %506 = vmatpush2.msra.mxu0 0.0
    %507 = vmatprep.subr.mxu0 0.0
    %508 = vmatpush2.msra.mxu0 0.0
    %509 = vmatprep.subr.mxu0 0.0
    %510 = vmatpush2.msra.mxu0 0.0
    %511 = vmatprep.subr.mxu0 0.0
    %512 = vmatpush2.msra.mxu0 0.0
    %513 = vmatprep.mubr.f32.mxu0 0.0
    %514 = vmatmul.mubr.f32.gmra.mxu0 %v447
    %v515 = vpop.f32.mrf.mxu0
    %v516 = vadd.f32 0.0, %v515
    %v517 = vpop.f32.mrf.mxu0
    %518 = vdwg.mxu0
    %v519 = vadd.f32 %v445, %v516
    %v520 = vmul.f32 %v519, 0.5
    %v521 = vsub.f32 %v520, %v436
    %v522 = vadd.f32 %v337, %v340
    %v523 = vrot.slane %v522, 4
    %v524 = vadd.f32 %v522, %v523
    %v525 = vrot.slane %v524, 2
    %v526 = vadd.f32 %v524, %v525
    %v527 = vrot.slane %v526, 1
    %v528 = vadd.f32 %v526, %v527
    %vm529 = vcmp.eq.s32.totalorder %v69, 0
    %v530 = vsel %vm529, 1, 0
    %v531 = vcvt.s32.f32 %v530
    %533 = vset.pattern.permute.xlu0 0
    %534 = vperm.xlu0 %533, %v521
    %v535 = vpop.permute.xlu0 %534
    %v537 = vmul.f32 %v531, %v535
    %v538 = vadd.f32 %v537, 0.0
    %v539 = vmul.f32 %v531, %v528
    %v540 = vadd.f32 %v539, 0.0
    %s541 = scalar_lea.vmem [#allocation2], 32
    %v542 = vld [vmem:[%s541] sm:$0xff]
    %v543 = vld [vmem:[%s541 + $0x8] sm:$0xff]
    %v544 = vld [vmem:[%s541 + $0x10] sm:$0xff]
    %v545 = vld [vmem:[%s541 + $0x18] sm:$0xff]
    %v547 = vsel %vm164, %v331, 0
    %v550 = vsel %vm164, %v332, 0
    %552 = vmatprep.subr.mxu0 0.0
    %553 = vmatpush1.msra.mxu0 0.0
    %554 = vmatprep.subr.mxu0 0.0
    %555 = vmatpush1.msra.mxu0 0.0
    %556 = vmatprep.subr.mxu0 0.0
    %557 = vmatpush1.msra.mxu0 0.0
    %558 = vmatprep.subr.mxu0 0.0
    %559 = vmatpush1.msra.mxu0 0.0
    %560 = vmatprep.subr.mxu0 0.0
    %561 = vmatpush1.msra.mxu0 0.0
    %562 = vmatprep.subr.mxu0 0.0
    %563 = vmatpush1.msra.mxu0 0.0
    %564 = vmatprep.subr.mxu0 0.0
    %565 = vmatpush1.msra.mxu0 0.0
    %566 = vmatprep.subr.mxu0 0.0
    %567 = vmatpush1.msra.mxu0 0.0
    %568 = vmatprep.subr.mxu0 0.0
    %569 = vmatpush1.msra.mxu0 0.0
    %570 = vmatprep.subr.mxu0 0.0
    %571 = vmatpush1.msra.mxu0 0.0
    %572 = vmatprep.subr.mxu0 0.0
    %573 = vmatpush1.msra.mxu0 0.0
    %574 = vmatprep.subr.mxu0 0.0
    %575 = vmatpush1.msra.mxu0 0.0
    %576 = vmatprep.subr.mxu0 0.0
    %577 = vmatpush1.msra.mxu0 %v545
    %578 = vmatprep.subr.mxu0 0.0
    %579 = vmatpush1.msra.mxu0 %v544
    %580 = vmatprep.subr.mxu0 0.0
    %581 = vmatpush1.msra.mxu0 %v543
    %582 = vmatprep.subr.mxu0 0.0
    %583 = vmatpush1.msra.mxu0 %v542
    %584 = vmatprep.subr.mxu0 0.0
    %585 = vmatpush2.msra.mxu0 0.0
    %586 = vmatprep.subr.mxu0 0.0
    %587 = vmatpush2.msra.mxu0 0.0
    %588 = vmatprep.subr.mxu0 0.0
    %589 = vmatpush2.msra.mxu0 0.0
    %590 = vmatprep.subr.mxu0 0.0
    %591 = vmatpush2.msra.mxu0 0.0
    %592 = vmatprep.subr.mxu0 0.0
    %593 = vmatpush2.msra.mxu0 0.0
    %594 = vmatprep.subr.mxu0 0.0
    %595 = vmatpush2.msra.mxu0 0.0
    %596 = vmatprep.subr.mxu0 0.0
    %597 = vmatpush2.msra.mxu0 0.0
    %598 = vmatprep.subr.mxu0 0.0
    %599 = vmatpush2.msra.mxu0 0.0
    %600 = vmatprep.subr.mxu0 0.0
    %601 = vmatpush2.msra.mxu0 0.0
    %602 = vmatprep.subr.mxu0 0.0
    %603 = vmatpush2.msra.mxu0 0.0
    %604 = vmatprep.subr.mxu0 0.0
    %605 = vmatpush2.msra.mxu0 0.0
    %606 = vmatprep.subr.mxu0 0.0
    %607 = vmatpush2.msra.mxu0 0.0
    %608 = vmatprep.subr.mxu0 0.0
    %609 = vmatpush2.msra.mxu0 0.0
    %610 = vmatprep.subr.mxu0 0.0
    %611 = vmatpush2.msra.mxu0 0.0
    %612 = vmatprep.subr.mxu0 0.0
    %613 = vmatpush2.msra.mxu0 0.0
    %614 = vmatprep.subr.mxu0 0.0
    %615 = vmatpush2.msra.mxu0 0.0
    %616 = vmatprep.mubr.f32.mxu0 0.0
    %617 = vmatmul.mubr.f32.gmra.mxu0 %v547
    %v618 = vpop.f32.mrf.mxu0
    %v619 = vadd.f32 0.0, %v618
    %v620 = vpop.f32.mrf.mxu0
    %621 = vmatprep.mubr.f32.mxu0 0.0
    %622 = vmatmul.mubr.f32.gmra.mxu0 %v550
    %v623 = vpop.f32.mrf.mxu0
    %v624 = vadd.f32 0.0, %v623
    %v625 = vpop.f32.mrf.mxu0
    %626 = vdwg.mxu0
    %v627 = vmul.f32 %v55, %v619
    %v628 = vmul.f32 %v56, %v624
    %629 = vmatprep.subr.mxu0 0.0
    %630 = vmatpush1.msra.mxu0 0.0
    %631 = vmatprep.subr.mxu0 0.0
    %632 = vmatpush1.msra.mxu0 0.0
    %633 = vmatprep.subr.mxu0 0.0
    %634 = vmatpush1.msra.mxu0 0.0
    %635 = vmatprep.subr.mxu0 0.0
    %636 = vmatpush1.msra.mxu0 0.0
    %637 = vmatprep.subr.mxu0 0.0
    %638 = vmatpush1.msra.mxu0 0.0
    %639 = vmatprep.subr.mxu0 0.0
    %640 = vmatpush1.msra.mxu0 0.0
    %641 = vmatprep.subr.mxu0 0.0
    %642 = vmatpush1.msra.mxu0 0.0
    %643 = vmatprep.subr.mxu0 0.0
    %644 = vmatpush1.msra.mxu0 0.0
    %645 = vmatprep.subr.mxu0 0.0
    %646 = vmatpush1.msra.mxu0 0.0
    %647 = vmatprep.subr.mxu0 0.0
    %648 = vmatpush1.msra.mxu0 0.0
    %649 = vmatprep.subr.mxu0 0.0
    %650 = vmatpush1.msra.mxu0 0.0
    %651 = vmatprep.subr.mxu0 0.0
    %652 = vmatpush1.msra.mxu0 0.0
    %653 = vmatprep.subr.mxu0 0.0
    %654 = vmatpush1.msra.mxu0 0.0
    %655 = vmatprep.subr.mxu0 0.0
    %656 = vmatpush1.msra.mxu0 0.0
    %657 = vmatprep.subr.mxu0 0.0
    %658 = vmatpush1.msra.mxu0 %v628
    %659 = vmatprep.subr.mxu0 0.0
    %660 = vmatpush1.msra.mxu0 %v627
    %661 = vmatprep.subr.mxu0 0.0
    %662 = vmatpush2.msra.mxu0 0.0
    %663 = vmatprep.subr.mxu0 0.0
    %664 = vmatpush2.msra.mxu0 0.0
    %665 = vmatprep.subr.mxu0 0.0
    %666 = vmatpush2.msra.mxu0 0.0
    %667 = vmatprep.subr.mxu0 0.0
    %668 = vmatpush2.msra.mxu0 0.0
    %669 = vmatprep.subr.mxu0 0.0
    %670 = vmatpush2.msra.mxu0 0.0
    %671 = vmatprep.subr.mxu0 0.0
    %672 = vmatpush2.msra.mxu0 0.0
    %673 = vmatprep.subr.mxu0 0.0
    %674 = vmatpush2.msra.mxu0 0.0
    %675 = vmatprep.subr.mxu0 0.0
    %676 = vmatpush2.msra.mxu0 0.0
    %677 = vmatprep.subr.mxu0 0.0
    %678 = vmatpush2.msra.mxu0 0.0
    %679 = vmatprep.subr.mxu0 0.0
    %680 = vmatpush2.msra.mxu0 0.0
    %681 = vmatprep.subr.mxu0 0.0
    %682 = vmatpush2.msra.mxu0 0.0
    %683 = vmatprep.subr.mxu0 0.0
    %684 = vmatpush2.msra.mxu0 0.0
    %685 = vmatprep.subr.mxu0 0.0
    %686 = vmatpush2.msra.mxu0 0.0
    %687 = vmatprep.subr.mxu0 0.0
    %688 = vmatpush2.msra.mxu0 0.0
    %689 = vmatprep.subr.mxu0 0.0
    %690 = vmatpush2.msra.mxu0 0.0
    %691 = vmatprep.subr.mxu0 0.0
    %692 = vmatpush2.msra.mxu0 0.0
    %693 = vmatprep.mubr.f32.mxu0 0.0
    %694 = vmatmul.mubr.f32.gmra.mxu0 %v249
    %v695 = vpop.f32.mrf.mxu0
    %v696 = vadd.f32 %v627, %v695
    %v697 = vpop.f32.mrf.mxu0
    %698 = vmatprep.mubr.f32.mxu0 0.0
    %699 = vmatmul.mubr.f32.gmra.mxu0 %v252
    %v700 = vpop.f32.mrf.mxu0
    %v701 = vadd.f32 %v628, %v700
    %v702 = vpop.f32.mrf.mxu0
    %703 = vdwg.mxu0
    %v704 = vmul.f32 %v55, %v696
    %v705 = vmul.f32 %v56, %v701
    %v706 = vmax.f32 %v704, 0.0
    %v707 = vmax.f32 %v705, 0.0
    %v708 = vmul.f32 %v706, %v706
    %v709 = vmul.f32 %v707, %v707
    %v710 = vsel %vm164, %v708, 0.0
    %711 = vadd.xlane.f32.xlu0 %v710
    %v712 = vpop.xlane.xlu0 %711
    %v713 = vsel %vm164, %v709, 0.0
    %714 = vadd.xlane.f32.xlu0 %v713
    %v715 = vpop.xlane.xlu0 %714
    %716 = vmatprep.subr.mxu0 0.0
    %717 = vmatpush1.msra.mxu0 0.0
    %718 = vmatprep.subr.mxu0 0.0
    %719 = vmatpush1.msra.mxu0 0.0
    %720 = vmatprep.subr.mxu0 0.0
    %721 = vmatpush1.msra.mxu0 0.0
    %722 = vmatprep.subr.mxu0 0.0
    %723 = vmatpush1.msra.mxu0 0.0
    %724 = vmatprep.subr.mxu0 0.0
    %725 = vmatpush1.msra.mxu0 0.0
    %726 = vmatprep.subr.mxu0 0.0
    %727 = vmatpush1.msra.mxu0 0.0
    %728 = vmatprep.subr.mxu0 0.0
    %729 = vmatpush1.msra.mxu0 0.0
    %730 = vmatprep.subr.mxu0 0.0
    %731 = vmatpush1.msra.mxu0 0.0
    %732 = vmatprep.subr.mxu0 0.0
    %733 = vmatpush1.msra.mxu0 0.0
    %734 = vmatprep.subr.mxu0 0.0
    %735 = vmatpush1.msra.mxu0 0.0
    %736 = vmatprep.subr.mxu0 0.0
    %737 = vmatpush1.msra.mxu0 0.0
    %738 = vmatprep.subr.mxu0 0.0
    %739 = vmatpush1.msra.mxu0 0.0
    %740 = vmatprep.subr.mxu0 0.0
    %741 = vmatpush1.msra.mxu0 0.0
    %742 = vmatprep.subr.mxu0 0.0
    %743 = vmatpush1.msra.mxu0 0.0
    %744 = vmatprep.subr.mxu0 0.0
    %745 = vmatpush1.msra.mxu0 %v707
    %746 = vmatprep.subr.mxu0 0.0
    %747 = vmatpush1.msra.mxu0 %v706
    %748 = vmatprep.subr.mxu0 0.0
    %749 = vmatpush2.msra.mxu0 0.0
    %750 = vmatprep.subr.mxu0 0.0
    %751 = vmatpush2.msra.mxu0 0.0
    %752 = vmatprep.subr.mxu0 0.0
    %753 = vmatpush2.msra.mxu0 0.0
    %754 = vmatprep.subr.mxu0 0.0
    %755 = vmatpush2.msra.mxu0 0.0
    %756 = vmatprep.subr.mxu0 0.0
    %757 = vmatpush2.msra.mxu0 0.0
    %758 = vmatprep.subr.mxu0 0.0
    %759 = vmatpush2.msra.mxu0 0.0
    %760 = vmatprep.subr.mxu0 0.0
    %761 = vmatpush2.msra.mxu0 0.0
    %762 = vmatprep.subr.mxu0 0.0
    %763 = vmatpush2.msra.mxu0 0.0
    %764 = vmatprep.subr.mxu0 0.0
    %765 = vmatpush2.msra.mxu0 0.0
    %766 = vmatprep.subr.mxu0 0.0
    %767 = vmatpush2.msra.mxu0 0.0
    %768 = vmatprep.subr.mxu0 0.0
    %769 = vmatpush2.msra.mxu0 0.0
    %770 = vmatprep.subr.mxu0 0.0
    %771 = vmatpush2.msra.mxu0 0.0
    %772 = vmatprep.subr.mxu0 0.0
    %773 = vmatpush2.msra.mxu0 0.0
    %774 = vmatprep.subr.mxu0 0.0
    %775 = vmatpush2.msra.mxu0 0.0
    %776 = vmatprep.subr.mxu0 0.0
    %777 = vmatpush2.msra.mxu0 0.0
    %778 = vmatprep.subr.mxu0 0.0
    %779 = vmatpush2.msra.mxu0 0.0
    %780 = vmatprep.mubr.f32.mxu0 0.0
    %781 = vmatmul.mubr.f32.gmra.mxu0 %v342
    %v782 = vpop.f32.mrf.mxu0
    %v783 = vadd.f32 0.0, %v782
    %v784 = vpop.f32.mrf.mxu0
    %785 = vmatprep.mubr.f32.mxu0 0.0
    %786 = vmatmul.mubr.f32.gmra.mxu0 %v345
    %v787 = vpop.f32.mrf.mxu0
    %v788 = vadd.f32 0.0, %v787
    %v789 = vpop.f32.mrf.mxu0
    %790 = vdwg.mxu0
    %v791 = vmul.f32 %v706, %v783
    %v792 = vmul.f32 %v707, %v788
    %v793 = vsel %vm164, %v791, 0.0
    %794 = vadd.xlane.f32.xlu0 %v793
    %v795 = vpop.xlane.xlu0 %794
    %v796 = vsel %vm164, %v792, 0.0
    %797 = vadd.xlane.f32.xlu0 %v796
    %v798 = vpop.xlane.xlu0 %797
    %v799 = vadd.f32 %v795, %v798
    %v800 = vrot.slane %v799, 4
    %v801 = vadd.f32 %v799, %v800
    %v802 = vrot.slane %v801, 2
    %v803 = vadd.f32 %v801, %v802
    %v804 = vrot.slane %v803, 1
    %v805 = vadd.f32 %v803, %v804
    %v806 = vmul.f32 %v57, %v712
    %v807 = vmul.f32 %v58, %v715
    %v808 = vadd.f32 %v806, %v807
    %v809 = vrot.slane %v808, 4
    %v810 = vadd.f32 %v808, %v809
    %v811 = vrot.slane %v810, 2
    %v812 = vadd.f32 %v810, %v811
    %v813 = vrot.slane %v812, 1
    %v814 = vadd.f32 %v812, %v813
    %815 = vmatprep.subr.mxu0 0.0
    %816 = vmatpush1.msra.mxu0 0.0
    %817 = vmatprep.subr.mxu0 0.0
    %818 = vmatpush1.msra.mxu0 0.0
    %819 = vmatprep.subr.mxu0 0.0
    %820 = vmatpush1.msra.mxu0 0.0
    %821 = vmatprep.subr.mxu0 0.0
    %822 = vmatpush1.msra.mxu0 0.0
    %823 = vmatprep.subr.mxu0 0.0
    %824 = vmatpush1.msra.mxu0 0.0
    %825 = vmatprep.subr.mxu0 0.0
    %826 = vmatpush1.msra.mxu0 0.0
    %827 = vmatprep.subr.mxu0 0.0
    %828 = vmatpush1.msra.mxu0 0.0
    %829 = vmatprep.subr.mxu0 0.0
    %830 = vmatpush1.msra.mxu0 0.0
    %831 = vmatprep.subr.mxu0 0.0
    %832 = vmatpush1.msra.mxu0 0.0
    %833 = vmatprep.subr.mxu0 0.0
    %834 = vmatpush1.msra.mxu0 0.0
    %835 = vmatprep.subr.mxu0 0.0
    %836 = vmatpush1.msra.mxu0 0.0
    %837 = vmatprep.subr.mxu0 0.0
    %838 = vmatpush1.msra.mxu0 0.0
    %839 = vmatprep.subr.mxu0 0.0
    %840 = vmatpush1.msra.mxu0 0.0
    %841 = vmatprep.subr.mxu0 0.0
    %842 = vmatpush1.msra.mxu0 0.0
    %843 = vmatprep.subr.mxu0 0.0
    %844 = vmatpush1.msra.mxu0 %v715
    %845 = vmatprep.subr.mxu0 0.0
    %846 = vmatpush1.msra.mxu0 %v712
    %847 = vmatprep.subr.mxu0 0.0
    %848 = vmatpush2.msra.mxu0 0.0
    %849 = vmatprep.subr.mxu0 0.0
    %850 = vmatpush2.msra.mxu0 0.0
    %851 = vmatprep.subr.mxu0 0.0
    %852 = vmatpush2.msra.mxu0 0.0
    %853 = vmatprep.subr.mxu0 0.0
    %854 = vmatpush2.msra.mxu0 0.0
    %855 = vmatprep.subr.mxu0 0.0
    %856 = vmatpush2.msra.mxu0 0.0
    %857 = vmatprep.subr.mxu0 0.0
    %858 = vmatpush2.msra.mxu0 0.0
    %859 = vmatprep.subr.mxu0 0.0
    %860 = vmatpush2.msra.mxu0 0.0
    %861 = vmatprep.subr.mxu0 0.0
    %862 = vmatpush2.msra.mxu0 0.0
    %863 = vmatprep.subr.mxu0 0.0
    %864 = vmatpush2.msra.mxu0 0.0
    %865 = vmatprep.subr.mxu0 0.0
    %866 = vmatpush2.msra.mxu0 0.0
    %867 = vmatprep.subr.mxu0 0.0
    %868 = vmatpush2.msra.mxu0 0.0
    %869 = vmatprep.subr.mxu0 0.0
    %870 = vmatpush2.msra.mxu0 0.0
    %871 = vmatprep.subr.mxu0 0.0
    %872 = vmatpush2.msra.mxu0 0.0
    %873 = vmatprep.subr.mxu0 0.0
    %874 = vmatpush2.msra.mxu0 0.0
    %875 = vmatprep.subr.mxu0 0.0
    %876 = vmatpush2.msra.mxu0 0.0
    %877 = vmatprep.subr.mxu0 0.0
    %878 = vmatpush2.msra.mxu0 0.0
    %879 = vmatprep.mubr.f32.mxu0 0.0
    %880 = vmatmul.mubr.f32.gmra.mxu0 %v447
    %v881 = vpop.f32.mrf.mxu0
    %v882 = vadd.f32 0.0, %v881
    %v883 = vpop.f32.mrf.mxu0
    %884 = vdwg.mxu0
    %v885 = vadd.f32 %v814, %v882
    %v886 = vmul.f32 %v885, 0.5
    %v887 = vsub.f32 %v886, %v805
    %v888 = vadd.f32 %v712, %v715
    %v889 = vrot.slane %v888, 4
    %v890 = vadd.f32 %v888, %v889
    %v891 = vrot.slane %v890, 2
    %v892 = vadd.f32 %v890, %v891
    %v893 = vrot.slane %v892, 1
    %v894 = vadd.f32 %v892, %v893
    %vm895 = vcmp.eq.s32.totalorder %v69, 1
    %v896 = vsel %vm895, 1, 0
    %v897 = vcvt.s32.f32 %v896
    %899 = vset.pattern.permute.xlu0 0
    %900 = vperm.xlu0 %899, %v887
    %v901 = vpop.permute.xlu0 %900
    %v903 = vmul.f32 %v897, %v901
    %v904 = vadd.f32 %v538, %v903
    %v905 = vmul.f32 %v897, %v894
    %v906 = vadd.f32 %v540, %v905
    %s907 = scalar_lea.vmem [#allocation2], 64
    %v908 = vld [vmem:[%s907] sm:$0xff]
    %v909 = vld [vmem:[%s907 + $0x8] sm:$0xff]
    %v910 = vld [vmem:[%s907 + $0x10] sm:$0xff]
    %v911 = vld [vmem:[%s907 + $0x18] sm:$0xff]
    %v913 = vsel %vm164, %v706, 0
    %v916 = vsel %vm164, %v707, 0
    %918 = vmatprep.subr.mxu0 0.0
    %919 = vmatpush1.msra.mxu0 0.0
    %920 = vmatprep.subr.mxu0 0.0
    %921 = vmatpush1.msra.mxu0 0.0
    %922 = vmatprep.subr.mxu0 0.0
    %923 = vmatpush1.msra.mxu0 0.0
    %924 = vmatprep.subr.mxu0 0.0
    %925 = vmatpush1.msra.mxu0 0.0
    %926 = vmatprep.subr.mxu0 0.0
    %927 = vmatpush1.msra.mxu0 0.0
    %928 = vmatprep.subr.mxu0 0.0
    %929 = vmatpush1.msra.mxu0 0.0
    %930 = vmatprep.subr.mxu0 0.0
    %931 = vmatpush1.msra.mxu0 0.0
    %932 = vmatprep.subr.mxu0 0.0
    %933 = vmatpush1.msra.mxu0 0.0
    %934 = vmatprep.subr.mxu0 0.0
    %935 = vmatpush1.msra.mxu0 0.0
    %936 = vmatprep.subr.mxu0 0.0
    %937 = vmatpush1.msra.mxu0 0.0
    %938 = vmatprep.subr.mxu0 0.0
    %939 = vmatpush1.msra.mxu0 0.0
    %940 = vmatprep.subr.mxu0 0.0
    %941 = vmatpush1.msra.mxu0 0.0
    %942 = vmatprep.subr.mxu0 0.0
    %943 = vmatpush1.msra.mxu0 %v911
    %944 = vmatprep.subr.mxu0 0.0
    %945 = vmatpush1.msra.mxu0 %v910
    %946 = vmatprep.subr.mxu0 0.0
    %947 = vmatpush1.msra.mxu0 %v909
    %948 = vmatprep.subr.mxu0 0.0
    %949 = vmatpush1.msra.mxu0 %v908
    %950 = vmatprep.subr.mxu0 0.0
    %951 = vmatpush2.msra.mxu0 0.0
    %952 = vmatprep.subr.mxu0 0.0
    %953 = vmatpush2.msra.mxu0 0.0
    %954 = vmatprep.subr.mxu0 0.0
    %955 = vmatpush2.msra.mxu0 0.0
    %956 = vmatprep.subr.mxu0 0.0
    %957 = vmatpush2.msra.mxu0 0.0
    %958 = vmatprep.subr.mxu0 0.0
    %959 = vmatpush2.msra.mxu0 0.0
    %960 = vmatprep.subr.mxu0 0.0
    %961 = vmatpush2.msra.mxu0 0.0
    %962 = vmatprep.subr.mxu0 0.0
    %963 = vmatpush2.msra.mxu0 0.0
    %964 = vmatprep.subr.mxu0 0.0
    %965 = vmatpush2.msra.mxu0 0.0
    %966 = vmatprep.subr.mxu0 0.0
    %967 = vmatpush2.msra.mxu0 0.0
    %968 = vmatprep.subr.mxu0 0.0
    %969 = vmatpush2.msra.mxu0 0.0
    %970 = vmatprep.subr.mxu0 0.0
    %971 = vmatpush2.msra.mxu0 0.0
    %972 = vmatprep.subr.mxu0 0.0
    %973 = vmatpush2.msra.mxu0 0.0
    %974 = vmatprep.subr.mxu0 0.0
    %975 = vmatpush2.msra.mxu0 0.0
    %976 = vmatprep.subr.mxu0 0.0
    %977 = vmatpush2.msra.mxu0 0.0
    %978 = vmatprep.subr.mxu0 0.0
    %979 = vmatpush2.msra.mxu0 0.0
    %980 = vmatprep.subr.mxu0 0.0
    %981 = vmatpush2.msra.mxu0 0.0
    %982 = vmatprep.mubr.f32.mxu0 0.0
    %983 = vmatmul.mubr.f32.gmra.mxu0 %v913
    %v984 = vpop.f32.mrf.mxu0
    %v985 = vadd.f32 0.0, %v984
    %v986 = vpop.f32.mrf.mxu0
    %987 = vmatprep.mubr.f32.mxu0 0.0
    %988 = vmatmul.mubr.f32.gmra.mxu0 %v916
    %v989 = vpop.f32.mrf.mxu0
    %v990 = vadd.f32 0.0, %v989
    %v991 = vpop.f32.mrf.mxu0
    %992 = vdwg.mxu0
    %v993 = vmul.f32 %v55, %v985
    %v994 = vmul.f32 %v56, %v990
    %995 = vmatprep.subr.mxu0 0.0
    %996 = vmatpush1.msra.mxu0 0.0
    %997 = vmatprep.subr.mxu0 0.0
    %998 = vmatpush1.msra.mxu0 0.0
    %999 = vmatprep.subr.mxu0 0.0
    %1000 = vmatpush1.msra.mxu0 0.0
    %1001 = vmatprep.subr.mxu0 0.0
    %1002 = vmatpush1.msra.mxu0 0.0
    %1003 = vmatprep.subr.mxu0 0.0
    %1004 = vmatpush1.msra.mxu0 0.0
    %1005 = vmatprep.subr.mxu0 0.0
    %1006 = vmatpush1.msra.mxu0 0.0
    %1007 = vmatprep.subr.mxu0 0.0
    %1008 = vmatpush1.msra.mxu0 0.0
    %1009 = vmatprep.subr.mxu0 0.0
    %1010 = vmatpush1.msra.mxu0 0.0
    %1011 = vmatprep.subr.mxu0 0.0
    %1012 = vmatpush1.msra.mxu0 0.0
    %1013 = vmatprep.subr.mxu0 0.0
    %1014 = vmatpush1.msra.mxu0 0.0
    %1015 = vmatprep.subr.mxu0 0.0
    %1016 = vmatpush1.msra.mxu0 0.0
    %1017 = vmatprep.subr.mxu0 0.0
    %1018 = vmatpush1.msra.mxu0 0.0
    %1019 = vmatprep.subr.mxu0 0.0
    %1020 = vmatpush1.msra.mxu0 0.0
    %1021 = vmatprep.subr.mxu0 0.0
    %1022 = vmatpush1.msra.mxu0 0.0
    %1023 = vmatprep.subr.mxu0 0.0
    %1024 = vmatpush1.msra.mxu0 %v994
    %1025 = vmatprep.subr.mxu0 0.0
    %1026 = vmatpush1.msra.mxu0 %v993
    %1027 = vmatprep.subr.mxu0 0.0
    %1028 = vmatpush2.msra.mxu0 0.0
    %1029 = vmatprep.subr.mxu0 0.0
    %1030 = vmatpush2.msra.mxu0 0.0
    %1031 = vmatprep.subr.mxu0 0.0
    %1032 = vmatpush2.msra.mxu0 0.0
    %1033 = vmatprep.subr.mxu0 0.0
    %1034 = vmatpush2.msra.mxu0 0.0
    %1035 = vmatprep.subr.mxu0 0.0
    %1036 = vmatpush2.msra.mxu0 0.0
    %1037 = vmatprep.subr.mxu0 0.0
    %1038 = vmatpush2.msra.mxu0 0.0
    %1039 = vmatprep.subr.mxu0 0.0
    %1040 = vmatpush2.msra.mxu0 0.0
    %1041 = vmatprep.subr.mxu0 0.0
    %1042 = vmatpush2.msra.mxu0 0.0
    %1043 = vmatprep.subr.mxu0 0.0
    %1044 = vmatpush2.msra.mxu0 0.0
    %1045 = vmatprep.subr.mxu0 0.0
    %1046 = vmatpush2.msra.mxu0 0.0
    %1047 = vmatprep.subr.mxu0 0.0
    %1048 = vmatpush2.msra.mxu0 0.0
    %1049 = vmatprep.subr.mxu0 0.0
    %1050 = vmatpush2.msra.mxu0 0.0
    %1051 = vmatprep.subr.mxu0 0.0
    %1052 = vmatpush2.msra.mxu0 0.0
    %1053 = vmatprep.subr.mxu0 0.0
    %1054 = vmatpush2.msra.mxu0 0.0
    %1055 = vmatprep.subr.mxu0 0.0
    %1056 = vmatpush2.msra.mxu0 0.0
    %1057 = vmatprep.subr.mxu0 0.0
    %1058 = vmatpush2.msra.mxu0 0.0
    %1059 = vmatprep.mubr.f32.mxu0 0.0
    %1060 = vmatmul.mubr.f32.gmra.mxu0 %v249
    %v1061 = vpop.f32.mrf.mxu0
    %v1062 = vadd.f32 %v993, %v1061
    %v1063 = vpop.f32.mrf.mxu0
    %1064 = vmatprep.mubr.f32.mxu0 0.0
    %1065 = vmatmul.mubr.f32.gmra.mxu0 %v252
    %v1066 = vpop.f32.mrf.mxu0
    %v1067 = vadd.f32 %v994, %v1066
    %v1068 = vpop.f32.mrf.mxu0
    %1069 = vdwg.mxu0
    %v1070 = vmul.f32 %v55, %v1062
    %v1071 = vmul.f32 %v56, %v1067
    %v1072 = vmax.f32 %v1070, 0.0
    %v1073 = vmax.f32 %v1071, 0.0
    %v1074 = vmul.f32 %v1072, %v1072
    %v1075 = vmul.f32 %v1073, %v1073
    %v1076 = vsel %vm164, %v1074, 0.0
    %1077 = vadd.xlane.f32.xlu0 %v1076
    %v1078 = vpop.xlane.xlu0 %1077
    %v1079 = vsel %vm164, %v1075, 0.0
    %1080 = vadd.xlane.f32.xlu0 %v1079
    %v1081 = vpop.xlane.xlu0 %1080
    %1082 = vmatprep.subr.mxu0 0.0
    %1083 = vmatpush1.msra.mxu0 0.0
    %1084 = vmatprep.subr.mxu0 0.0
    %1085 = vmatpush1.msra.mxu0 0.0
    %1086 = vmatprep.subr.mxu0 0.0
    %1087 = vmatpush1.msra.mxu0 0.0
    %1088 = vmatprep.subr.mxu0 0.0
    %1089 = vmatpush1.msra.mxu0 0.0
    %1090 = vmatprep.subr.mxu0 0.0
    %1091 = vmatpush1.msra.mxu0 0.0
    %1092 = vmatprep.subr.mxu0 0.0
    %1093 = vmatpush1.msra.mxu0 0.0
    %1094 = vmatprep.subr.mxu0 0.0
    %1095 = vmatpush1.msra.mxu0 0.0
    %1096 = vmatprep.subr.mxu0 0.0
    %1097 = vmatpush1.msra.mxu0 0.0
    %1098 = vmatprep.subr.mxu0 0.0
    %1099 = vmatpush1.msra.mxu0 0.0
    %1100 = vmatprep.subr.mxu0 0.0
    %1101 = vmatpush1.msra.mxu0 0.0
    %1102 = vmatprep.subr.mxu0 0.0
    %1103 = vmatpush1.msra.mxu0 0.0
    %1104 = vmatprep.subr.mxu0 0.0
    %1105 = vmatpush1.msra.mxu0 0.0
    %1106 = vmatprep.subr.mxu0 0.0
    %1107 = vmatpush1.msra.mxu0 0.0
    %1108 = vmatprep.subr.mxu0 0.0
    %1109 = vmatpush1.msra.mxu0 0.0
    %1110 = vmatprep.subr.mxu0 0.0
    %1111 = vmatpush1.msra.mxu0 %v1073
    %1112 = vmatprep.subr.mxu0 0.0
    %1113 = vmatpush1.msra.mxu0 %v1072
    %1114 = vmatprep.subr.mxu0 0.0
    %1115 = vmatpush2.msra.mxu0 0.0
    %1116 = vmatprep.subr.mxu0 0.0
    %1117 = vmatpush2.msra.mxu0 0.0
    %1118 = vmatprep.subr.mxu0 0.0
    %1119 = vmatpush2.msra.mxu0 0.0
    %1120 = vmatprep.subr.mxu0 0.0
    %1121 = vmatpush2.msra.mxu0 0.0
    %1122 = vmatprep.subr.mxu0 0.0
    %1123 = vmatpush2.msra.mxu0 0.0
    %1124 = vmatprep.subr.mxu0 0.0
    %1125 = vmatpush2.msra.mxu0 0.0
    %1126 = vmatprep.subr.mxu0 0.0
    %1127 = vmatpush2.msra.mxu0 0.0
    %1128 = vmatprep.subr.mxu0 0.0
    %1129 = vmatpush2.msra.mxu0 0.0
    %1130 = vmatprep.subr.mxu0 0.0
    %1131 = vmatpush2.msra.mxu0 0.0
    %1132 = vmatprep.subr.mxu0 0.0
    %1133 = vmatpush2.msra.mxu0 0.0
    %1134 = vmatprep.subr.mxu0 0.0
    %1135 = vmatpush2.msra.mxu0 0.0
    %1136 = vmatprep.subr.mxu0 0.0
    %1137 = vmatpush2.msra.mxu0 0.0
    %1138 = vmatprep.subr.mxu0 0.0
    %1139 = vmatpush2.msra.mxu0 0.0
    %1140 = vmatprep.subr.mxu0 0.0
    %1141 = vmatpush2.msra.mxu0 0.0
    %1142 = vmatprep.subr.mxu0 0.0
    %1143 = vmatpush2.msra.mxu0 0.0
    %1144 = vmatprep.subr.mxu0 0.0
    %1145 = vmatpush2.msra.mxu0 0.0
    %1146 = vmatprep.mubr.f32.mxu0 0.0
    %1147 = vmatmul.mubr.f32.gmra.mxu0 %v342
    %v1148 = vpop.f32.mrf.mxu0
    %v1149 = vadd.f32 0.0, %v1148
    %v1150 = vpop.f32.mrf.mxu0
    %1151 = vmatprep.mubr.f32.mxu0 0.0
    %1152 = vmatmul.mubr.f32.gmra.mxu0 %v345
    %v1153 = vpop.f32.mrf.mxu0
    %v1154 = vadd.f32 0.0, %v1153
    %v1155 = vpop.f32.mrf.mxu0
    %1156 = vdwg.mxu0
    %v1157 = vmul.f32 %v1072, %v1149
    %v1158 = vmul.f32 %v1073, %v1154
    %v1159 = vsel %vm164, %v1157, 0.0
    %1160 = vadd.xlane.f32.xlu0 %v1159
    %v1161 = vpop.xlane.xlu0 %1160
    %v1162 = vsel %vm164, %v1158, 0.0
    %1163 = vadd.xlane.f32.xlu0 %v1162
    %v1164 = vpop.xlane.xlu0 %1163
    %v1165 = vadd.f32 %v1161, %v1164
    %v1166 = vrot.slane %v1165, 4
    %v1167 = vadd.f32 %v1165, %v1166
    %v1168 = vrot.slane %v1167, 2
    %v1169 = vadd.f32 %v1167, %v1168
    %v1170 = vrot.slane %v1169, 1
    %v1171 = vadd.f32 %v1169, %v1170
    %v1172 = vmul.f32 %v57, %v1078
    %v1173 = vmul.f32 %v58, %v1081
    %v1174 = vadd.f32 %v1172, %v1173
    %v1175 = vrot.slane %v1174, 4
    %v1176 = vadd.f32 %v1174, %v1175
    %v1177 = vrot.slane %v1176, 2
    %v1178 = vadd.f32 %v1176, %v1177
    %v1179 = vrot.slane %v1178, 1
    %v1180 = vadd.f32 %v1178, %v1179
    %1181 = vmatprep.subr.mxu0 0.0
    %1182 = vmatpush1.msra.mxu0 0.0
    %1183 = vmatprep.subr.mxu0 0.0
    %1184 = vmatpush1.msra.mxu0 0.0
    %1185 = vmatprep.subr.mxu0 0.0
    %1186 = vmatpush1.msra.mxu0 0.0
    %1187 = vmatprep.subr.mxu0 0.0
    %1188 = vmatpush1.msra.mxu0 0.0
    %1189 = vmatprep.subr.mxu0 0.0
    %1190 = vmatpush1.msra.mxu0 0.0
    %1191 = vmatprep.subr.mxu0 0.0
    %1192 = vmatpush1.msra.mxu0 0.0
    %1193 = vmatprep.subr.mxu0 0.0
    %1194 = vmatpush1.msra.mxu0 0.0
    %1195 = vmatprep.subr.mxu0 0.0
    %1196 = vmatpush1.msra.mxu0 0.0
    %1197 = vmatprep.subr.mxu0 0.0
    %1198 = vmatpush1.msra.mxu0 0.0
    %1199 = vmatprep.subr.mxu0 0.0
    %1200 = vmatpush1.msra.mxu0 0.0
    %1201 = vmatprep.subr.mxu0 0.0
    %1202 = vmatpush1.msra.mxu0 0.0
    %1203 = vmatprep.subr.mxu0 0.0
    %1204 = vmatpush1.msra.mxu0 0.0
    %1205 = vmatprep.subr.mxu0 0.0
    %1206 = vmatpush1.msra.mxu0 0.0
    %1207 = vmatprep.subr.mxu0 0.0
    %1208 = vmatpush1.msra.mxu0 0.0
    %1209 = vmatprep.subr.mxu0 0.0
    %1210 = vmatpush1.msra.mxu0 %v1081
    %1211 = vmatprep.subr.mxu0 0.0
    %1212 = vmatpush1.msra.mxu0 %v1078
    %1213 = vmatprep.subr.mxu0 0.0
    %1214 = vmatpush2.msra.mxu0 0.0
    %1215 = vmatprep.subr.mxu0 0.0
    %1216 = vmatpush2.msra.mxu0 0.0
    %1217 = vmatprep.subr.mxu0 0.0
    %1218 = vmatpush2.msra.mxu0 0.0
    %1219 = vmatprep.subr.mxu0 0.0
    %1220 = vmatpush2.msra.mxu0 0.0
    %1221 = vmatprep.subr.mxu0 0.0
    %1222 = vmatpush2.msra.mxu0 0.0
    %1223 = vmatprep.subr.mxu0 0.0
    %1224 = vmatpush2.msra.mxu0 0.0
    %1225 = vmatprep.subr.mxu0 0.0
    %1226 = vmatpush2.msra.mxu0 0.0
    %1227 = vmatprep.subr.mxu0 0.0
    %1228 = vmatpush2.msra.mxu0 0.0
    %1229 = vmatprep.subr.mxu0 0.0
    %1230 = vmatpush2.msra.mxu0 0.0
    %1231 = vmatprep.subr.mxu0 0.0
    %1232 = vmatpush2.msra.mxu0 0.0
    %1233 = vmatprep.subr.mxu0 0.0
    %1234 = vmatpush2.msra.mxu0 0.0
    %1235 = vmatprep.subr.mxu0 0.0
    %1236 = vmatpush2.msra.mxu0 0.0
    %1237 = vmatprep.subr.mxu0 0.0
    %1238 = vmatpush2.msra.mxu0 0.0
    %1239 = vmatprep.subr.mxu0 0.0
    %1240 = vmatpush2.msra.mxu0 0.0
    %1241 = vmatprep.subr.mxu0 0.0
    %1242 = vmatpush2.msra.mxu0 0.0
    %1243 = vmatprep.subr.mxu0 0.0
    %1244 = vmatpush2.msra.mxu0 0.0
    %1245 = vmatprep.mubr.f32.mxu0 0.0
    %1246 = vmatmul.mubr.f32.gmra.mxu0 %v447
    %v1247 = vpop.f32.mrf.mxu0
    %v1248 = vadd.f32 0.0, %v1247
    %v1249 = vpop.f32.mrf.mxu0
    %1250 = vdwg.mxu0
    %v1251 = vadd.f32 %v1180, %v1248
    %v1252 = vmul.f32 %v1251, 0.5
    %v1253 = vsub.f32 %v1252, %v1171
    %v1254 = vadd.f32 %v1078, %v1081
    %v1255 = vrot.slane %v1254, 4
    %v1256 = vadd.f32 %v1254, %v1255
    %v1257 = vrot.slane %v1256, 2
    %v1258 = vadd.f32 %v1256, %v1257
    %v1259 = vrot.slane %v1258, 1
    %v1260 = vadd.f32 %v1258, %v1259
    %vm1261 = vcmp.eq.s32.totalorder %v69, 2
    %v1262 = vsel %vm1261, 1, 0
    %v1263 = vcvt.s32.f32 %v1262
    %1265 = vset.pattern.permute.xlu0 0
    %1266 = vperm.xlu0 %1265, %v1253
    %v1267 = vpop.permute.xlu0 %1266
    %v1269 = vmul.f32 %v1263, %v1267
    %v1270 = vadd.f32 %v904, %v1269
    %v1271 = vmul.f32 %v1263, %v1260
    %v1272 = vadd.f32 %v906, %v1271
    %vm1273 = vcmask 16384
    %1274 = vst.msk [vmem:[#allocation5] sm:$0x1] %vm1273, %v1270
    %1275 = vst.msk [vmem:[#allocation6] sm:$0x1] %vm1273, %v1272
    // Predicated region
    $region26: #{tpu_custom_call.1} parent=1 // pred_check
      _
    $region27: #{tpu_custom_call.1} parent=1 // pred_check_branch
      %1277 = sbr.rel (0) target = $region29
    $region28: #{tpu_custom_call.1} parent=1 // pred_region
      %s1279 = ssub.s32 16, 16
      %1280 = vsyncadd [#allocation4], %s1279
      %s1282 = sshll.u32 [#allocation5], 4
      %s1283 = int_to_ptr.vmem [resolvable:$true] %s1282
      %1285 = dma.vmem_to_hbm [thread:$0]  %s1283, 16, %s5, [#allocation4]
    $region29: #{tpu_custom_call.1} parent=1 // pred_fallthru
      _
    // Predicated region
    $region30: #{tpu_custom_call.1} parent=1 // pred_check
      _
    $region31: #{tpu_custom_call.1} parent=1 // pred_check_branch
      %1287 = sbr.rel (0) target = $region33
    $region32: #{tpu_custom_call.1} parent=1 // pred_region
      %s1289 = ssub.s32 16, 16
      %1290 = vsyncadd [#allocation7], %s1289
      %s1292 = sshll.u32 [#allocation6], 4
      %s1293 = int_to_ptr.vmem [resolvable:$true] %s1292
      %1295 = dma.vmem_to_hbm [thread:$0]  %s1293, 16, %s6, [#allocation7]
    $region33: #{tpu_custom_call.1} parent=1 // pred_fallthru
      _
    // Predicated region
    $region34: #{tpu_custom_call.1} parent=1 // pred_check
      _
    $region35: #{tpu_custom_call.1} parent=1 // pred_check_branch
      %1297 = sbr.rel (0) target = $region37
    $region36: #{tpu_custom_call.1} parent=1 // pred_region
      %1298 = dma.done [#allocation4], 16
    $region37: #{tpu_custom_call.1} parent=1 // pred_fallthru
      _
    // Predicated region
    $region38: #{tpu_custom_call.1} parent=1 // pred_check
      _
    $region39: #{tpu_custom_call.1} parent=1 // pred_check_branch
      %1300 = sbr.rel (0) target = $region41
    $region40: #{tpu_custom_call.1} parent=1 // pred_region
      %1301 = dma.done [#allocation7], 16
    $region41: #{tpu_custom_call.1} parent=1 // pred_fallthru
      _
    %1302 = vsyncpa [#allocation3], 1
    %1303 = vsyncpa [#allocation4], 1
    %1304 = vsyncpa [#allocation7], 1

</llo_original>
